<compile_context>
chip_gen: v5e
topology: v5e:2x2
jax: 0.10.0
libtpu: 0.0.40
codegen_flags: <defaults>
</compile_context>

<pallas_src>
import jax
import jax.numpy as jnp
from jax.experimental import pallas as pl
from jax.experimental.pallas import tpu as pltpu

C_LIGHT = 300000000.0


# ----------------------------------------------------------------------------
# Pallas kernel: volume_f[d, bc, s] = sum_o x_f[o, bc, s] * kernel[d, o, s]
# (complex multiply, contraction over O, broadcast over D, elementwise in S).
# Diagonal in S -> MXU unusable; pure VPU kernel, goal is the HBM roofline
# (kernel-slab reuse, wide lane tiles) with VALU as the only hot slot.
# ----------------------------------------------------------------------------
def _make_contract_kernel(ts_chunk, d_static):
    def kernel(xr_ref, xi_ref, kr_ref, ki_ref, vr_ref, vi_ref):
        O = xr_ref.shape[0]
        ts = xr_ref.shape[2]
        D = kr_ref.shape[0]

        def process_depth(d):
            # For each (depth, lane-chunk): accumulate the O-term complex MAC
            # in a register-resident (BCt, cw) f32 pair, store once.
            for cs in range(0, ts, ts_chunk):
                cw = min(ts_chunk, ts - cs)
                sl = slice(cs, cs + cw)
                # o = 0 product initializes the accumulators (saves 2 adds/elem).
                xr = xr_ref[0, :, sl]                 # (BCt, cw) contiguous
                xi = xi_ref[0, :, sl]
                kr = kr_ref[d, 0:1, sl]               # (1, cw), sublane bcast
                ki = ki_ref[d, 0:1, sl]
                acc_r = xr * kr - xi * ki
                acc_i = xr * ki + xi * kr
                for o in range(1, O):                 # static: O known at trace
                    xr = xr_ref[o, :, sl]
                    xi = xi_ref[o, :, sl]
                    kr = kr_ref[d, o:o + 1, sl]
                    ki = ki_ref[d, o:o + 1, sl]
                    acc_r = acc_r + (xr * kr - xi * ki)
                    acc_i = acc_i + (xr * ki + xi * kr)
                vr_ref[d, :, sl] = acc_r
                vi_ref[d, :, sl] = acc_i

        if d_static:
            for d in range(D):                        # small D: fully static
                process_depth(d)
        else:
            @pl.loop(0, D)                            # dynamic d only on leading axes
            def _(d):
                process_depth(d)

    return kernel


# ----------------------------------------------------------------------------
# Tiling helpers
# ----------------------------------------------------------------------------
def _vmem_need_bytes(O, D, BCt, ts):
    # f32 planes, double-buffered pipeline: x (re+im), kernel (re+im), out
    # (re+im).  Accumulators live in vregs now; +15% and +2 MiB cover compiler
    # scratch / relayout temporaries so the estimate is honest on v7x (64 MiB).
    per_step = 4 * ts * (2 * O * BCt + 2 * O * D + 2 * BCt * D)
    return int(2 * per_step * 1.15) + (2 << 20)


def _tpu_vmem_capacity_bytes():
    try:
        return int(pltpu.get_tpu_info().vmem_capacity_bytes)
    except Exception:
        return 64 * 1024 * 1024        # conservative default (v7x per-core VMEM)


def _pick_bc_tile(BC, max_bct=32):
    # Several batch rows per tile so each kernel-slab fetch feeds BCt outputs.
    # BCt is second-minor for the output block: multiple of 8 or full extent.
    if BC <= max_bct:
        return BC
    if BC % 8 == 0:
        for cand in range(max_bct, 7, -8):
            if BC % cand == 0:
                return cand
    return BC     # full extent (always legal); only hit for odd BC > max_bct


def _pick_s_tiles(S, O, D, BCt, budget, max_ts=8192, acc_elems=4096):
    """Pick (lane sub-chunk, lane tile).

    ts_chunk bounds the register accumulator (the (BCt, ts_chunk) f32 pair
    stays within ~8 vregs).  ts is the largest multiple of ts_chunk (<= max_ts,
    <= S rounded up) whose double-buffered blocks fit the per-generation VMEM
    budget; the grid uses cdiv so a ragged last s-tile is handled by Pallas.
    """
    s128 = -(-S // 128) * 128
    ts_chunk = max(128, ((acc_elems // max(BCt, 1)) // 128) * 128)
    ts_chunk = min(ts_chunk, s128)
    s_cap = min(max_ts, -(-S // ts_chunk) * ts_chunk)
    ts = (s_cap // ts_chunk) * ts_chunk
    while ts > ts_chunk and _vmem_need_bytes(O, D, BCt, ts) > budget:
        ts -= ts_chunk
    if ts >= S:
        ts = S                        # full-extent lane block: always legal
        ts_chunk = min(ts_chunk, ts)
    # TODO(synk): if even ts == ts_chunk exceeds the budget (very large O*D on
    # v7x's 64 MiB VMEM), add a D grid axis instead of shrinking ts further.
    return ts_chunk, ts


def rsd_pallas_contract(xr, xi, kr, ki):
    O, BC, S = xr.shape
    D = kr.shape[0]

    BCt = _pick_bc_tile(BC)
    cap = _tpu_vmem_capacity_bytes()
    budget = (cap * 3) // 4            # ~96 MiB on v5e/v6e, ~48 MiB on v7x
    ts_chunk, ts = _pick_s_tiles(S, O, D, BCt, budget)

    need = _vmem_need_bytes(O, D, BCt, ts)
    vmem_limit = int(min(max(need + (8 << 20), 32 << 20), cap - (2 << 20)))

    grid = (pl.cdiv(S, ts), BC // BCt)     # s outer (parallel), bc inner

    x_spec = pl.BlockSpec((O, BCt, ts), lambda s, b: (0, b, s))
    k_spec = pl.BlockSpec((D, O, ts), lambda s, b: (0, 0, s))   # const across bc
    o_spec = pl.BlockSpec((D, BCt, ts), lambda s, b: (0, b, s))

    kernel = _make_contract_kernel(ts_chunk, d_static=(D <= 8))

    vr, vi = pl.pallas_call(
        kernel,
        out_shape=(jax.ShapeDtypeStruct((D, BC, S), jnp.float32),
                   jax.ShapeDtypeStruct((D, BC, S), jnp.float32)),
        grid=grid,
        in_specs=[x_spec, x_spec, k_spec, k_spec],
        out_specs=(o_spec, o_spec),
        compiler_params=pltpu.CompilerParams(
            dimension_semantics=("parallel", "arbitrary"),
            vmem_limit_bytes=vmem_limit),
    )(xr, xi, kr, ki)
    return vr, vi


# ----------------------------------------------------------------------------
# Parameter (RSD kernel buffer) construction -- mirrors __init__/_make_rsd_kernel
# (confocal, no falloff, use_pad=True, freq_range=None)
# ----------------------------------------------------------------------------
def make_rsd_kernel(O, N, wall_size, num_depth_planes=-1, z_min=0.0, z_max=2.0,
                    bin_length=0.0096):
    D = N if num_depth_planes <= 0 else num_depth_planes
    grid_z = (jnp.arange(D, dtype=jnp.float32) + 0.5) / D
    grid_z = grid_z * (z_max - z_min) + z_min
    bin_resolution = bin_length / C_LIGHT
    freqs = jnp.arange(O, dtype=jnp.float32) / ((O - 1) * 2)
    freqs = freqs / bin_resolution
    freqs = 2.0 * jnp.pi * freqs

    gx = ((jnp.arange(N, dtype=jnp.float32) + 0.5) / N - 0.5) * wall_size
    gy = ((jnp.arange(N, dtype=jnp.float32) + 0.5) / N - 0.5) * wall_size * -1.0
    Z, X, Y = jnp.meshgrid(grid_z, gx, gy, indexing="ij")        # (D, N, N)
    dists = jnp.sqrt(Z ** 2 + X ** 2 + Y ** 2)                   # light at (0,0,0)
    dists = dists[None]                                          # (1, D, N, N)

    scale_term = 2.0                                             # confocal
    kernel = jnp.exp(1j * freqs[:, None, None, None] / C_LIGHT * dists * scale_term)
    # falloff=False: no 1/dists
    kernel = jnp.pad(kernel, ((0, 0), (0, 0), (0, N), (0, N)))   # use_pad=True
    kernel = jnp.fft.fftn(kernel, axes=(-2, -1))                 # (O, D, 2N, 2N)
    return kernel.astype(jnp.complex64)


def kernel_planes(kernel):
    """Precompute the (D, O, S) f32 real/imag planes ONCE at setup time."""
    O, D, Hp, Wp = kernel.shape
    S = Hp * Wp
    k = jnp.transpose(kernel.reshape(O, D, S), (1, 0, 2))        # (D, O, S)
    kr = jnp.real(k).astype(jnp.float32)
    ki = jnp.imag(k).astype(jnp.float32)
    # TODO(synk): optional bf16 storage of kr/ki halves the dominant HBM stream
    # (big win on v5e) but needs the 1e-3 tolerance re-validated; kept f32.
    return kr, ki


# ----------------------------------------------------------------------------
# Forward pass (matches RSDConvolution.forward, use_pad=True / confocal)
# ----------------------------------------------------------------------------
def rsd_forward(x_f, kr, ki, num_freqs):
    # x_f: real tensor (B, C, O, H, W, 2) -> complex (B, C, O, H, W)
    xc = (x_f[..., 0] + 1j * x_f[..., 1]).astype(jnp.complex64)
    B, Cc, O, H, W = xc.shape
    xc = jnp.pad(xc, ((0, 0), (0, 0), (0, 0), (0, H), (0, W)))   # pad right/bottom
    xc = jnp.fft.fftn(xc, axes=(-2, -1))                         # (B, C, O, 2H, 2W)
    Hp, Wp = 2 * H, 2 * W
    S = Hp * Wp
    D = kr.shape[0]

    # (B, C, O, Hp, Wp) -> (O, B*C, S).  The transpose fuses with the
    # (unavoidable) real/imag plane extraction under jit, so it is not an extra
    # HBM pass, and it gives contiguous leading-axis x loads inside the kernel.
    xr = jnp.transpose(jnp.real(xc), (2, 0, 1, 3, 4)).reshape(O, B * Cc, S)
    xi = jnp.transpose(jnp.imag(xc), (2, 0, 1, 3, 4)).reshape(O, B * Cc, S)
    vr, vi = rsd_pallas_contract(xr.astype(jnp.float32), xi.astype(jnp.float32),
                                 kr, ki)

    # TODO(synk): the re/im recombine below is one extra HBM pass over the
    # largest array; a lane-interleaved kernel output would remove it but needs
    # a complex-bitcast path outside the kernel (not supported cleanly in XLA).
    volume_f = (vr + 1j * vi).reshape(D, B, Cc, Hp, Wp)

    # TODO(synk): FFT/IFFT have no Pallas TPU primitive; they remain jnp.fft glue.
    volume = jnp.fft.ifftn(volume_f, axes=(-2, -1))              # (D, B, C, Hp, Wp)
    h0, w0 = H // 2, W // 2
    volume = volume[..., h0:h0 + H, w0:w0 + W]                   # crop back to (H, W)
    volume = jnp.transpose(volume, (1, 2, 3, 4, 0))              # (B, C, H, W, D)
    volume = jnp.stack([jnp.real(volume), jnp.imag(volume)], axis=-1)
    return volume / num_freqs                                    # (B, C, H, W, D, 2)


def rsd_forward_ref(x_f, kernel, num_freqs):
    # Pure-JAX reference of the whole forward (for validation).
    xc = (x_f[..., 0] + 1j * x_f[..., 1]).astype(jnp.complex64)
    B, Cc, O, H, W = xc.shape
    xc = jnp.pad(xc, ((0, 0), (0, 0), (0, 0), (0, H), (0, W)))
    xc = jnp.fft.fftn(xc, axes=(-2, -1))
    volume_f = jnp.sum(xc[:, :, :, None] * kernel[None, None], axis=2)
    volume = jnp.fft.ifftn(volume_f, axes=(-2, -1))              # (B, C, D, Hp, Wp)
    h0, w0 = H // 2, W // 2
    volume = volume[..., h0:h0 + H, w0:w0 + W]
    volume = jnp.transpose(volume, (0, 1, 3, 4, 2))              # (B, C, H, W, D)
    volume = jnp.stack([jnp.real(volume), jnp.imag(volume)], axis=-1)
    return volume / num_freqs


if __name__ == "__main__":
    # Small deterministic example consistent with the module:
    # O=4 frequencies, N=8 pixels, D=N=8 depth planes, wall_size=2.0
    B, Cc, O, N = 2, 2, 4, 8
    H = W = N

    kernel = make_rsd_kernel(O, N, wall_size=2.0)    # (O, D, 2N, 2N) complex64
    kr, ki = kernel_planes(kernel)                   # (D, O, S) f32, setup-time

    key = jax.random.PRNGKey(0)
    x_f = jax.random.normal(key, (B, Cc, O, H, W, 2), dtype=jnp.float32)

    out = jax.jit(lambda x: rsd_forward(x, kr, ki, O))(x_f)
    out = jax.block_until_ready(out)

    ref = jax.jit(lambda x: rsd_forward_ref(x, kernel, O))(x_f)
    ref = jax.block_until_ready(ref)

    assert out.shape == (B, Cc, H, W, N, 2), out.shape
    max_err = float(jnp.max(jnp.abs(out - ref)))
    assert jnp.allclose(out, ref, rtol=1e-3, atol=1e-3), max_err
    print("KERNEL_OK")
</pallas_src>

<mosaic_0001>
module attributes {stable_mosaic.version = 11 : i64} {
  func.func @kernel(%arg0: i32, %arg1: i32, %arg2: memref<4x4x256xf32, #tpu.memory_space<vmem>>, %arg3: memref<4x4x256xf32, #tpu.memory_space<vmem>>, %arg4: memref<8x4x256xf32, #tpu.memory_space<vmem>>, %arg5: memref<8x4x256xf32, #tpu.memory_space<vmem>>, %arg6: memref<8x4x256xf32, #tpu.memory_space<vmem>>, %arg7: memref<8x4x256xf32, #tpu.memory_space<vmem>>) attributes {dimension_semantics = [#tpu.dimension_semantics<parallel>, #tpu.dimension_semantics<arbitrary>], iteration_bounds = array<i64: 1, 1>, scalar_prefetch = 0 : i64, scratch_operands = 0 : i64, tpu.core_type = #tpu.core_type<tc>, window_params = [{transform_indices = @transform_0, window_bounds = array<i64: 4, 4, 256>}, {transform_indices = @transform_1, window_bounds = array<i64: 4, 4, 256>}, {transform_indices = @transform_2, window_bounds = array<i64: 8, 4, 256>}, {transform_indices = @transform_3, window_bounds = array<i64: 8, 4, 256>}, {transform_indices = @transform_4, window_bounds = array<i64: 8, 4, 256>}, {transform_indices = @transform_5, window_bounds = array<i64: 8, 4, 256>}]} {
    %c0 = arith.constant 0 : index
    %c0_0 = arith.constant 0 : index
    %c0_1 = arith.constant 0 : index
    %0 = vector.load %arg2[%c0, %c0_0, %c0_1] : memref<4x4x256xf32, #tpu.memory_space<vmem>>, vector<1x4x256xf32>
    %1 = vector.shape_cast %0 : vector<1x4x256xf32> to vector<4x256xf32>
    %c0_2 = arith.constant 0 : index
    %c0_3 = arith.constant 0 : index
    %c0_4 = arith.constant 0 : index
    %2 = vector.load %arg3[%c0_2, %c0_3, %c0_4] : memref<4x4x256xf32, #tpu.memory_space<vmem>>, vector<1x4x256xf32>
    %3 = vector.shape_cast %2 : vector<1x4x256xf32> to vector<4x256xf32>
    %c0_5 = arith.constant 0 : index
    %c0_6 = arith.constant 0 : index
    %c0_7 = arith.constant 0 : index
    %4 = vector.load %arg4[%c0_5, %c0_6, %c0_7] : memref<8x4x256xf32, #tpu.memory_space<vmem>>, vector<1x1x256xf32>
    %5 = vector.shape_cast %4 : vector<1x1x256xf32> to vector<1x256xf32>
    %c0_8 = arith.constant 0 : index
    %c0_9 = arith.constant 0 : index
    %c0_10 = arith.constant 0 : index
    %6 = vector.load %arg5[%c0_8, %c0_9, %c0_10] : memref<8x4x256xf32, #tpu.memory_space<vmem>>, vector<1x1x256xf32>
    %7 = vector.shape_cast %6 : vector<1x1x256xf32> to vector<1x256xf32>
    %8 = vector.broadcast %5 : vector<1x256xf32> to vector<4x256xf32>
    %9 = arith.mulf %1, %8 : vector<4x256xf32>
    %10 = vector.broadcast %7 : vector<1x256xf32> to vector<4x256xf32>
    %11 = arith.mulf %3, %10 : vector<4x256xf32>
    %12 = arith.subf %9, %11 : vector<4x256xf32>
    %13 = vector.broadcast %7 : vector<1x256xf32> to vector<4x256xf32>
    %14 = arith.mulf %1, %13 : vector<4x256xf32>
    %15 = vector.broadcast %5 : vector<1x256xf32> to vector<4x256xf32>
    %16 = arith.mulf %3, %15 : vector<4x256xf32>
    %17 = arith.addf %14, %16 : vector<4x256xf32>
    %c1 = arith.constant 1 : index
    %c0_11 = arith.constant 0 : index
    %c0_12 = arith.constant 0 : index
    %18 = vector.load %arg2[%c1, %c0_11, %c0_12] : memref<4x4x256xf32, #tpu.memory_space<vmem>>, vector<1x4x256xf32>
    %19 = vector.shape_cast %18 : vector<1x4x256xf32> to vector<4x256xf32>
    %c1_13 = arith.constant 1 : index
    %c0_14 = arith.constant 0 : index
    %c0_15 = arith.constant 0 : index
    %20 = vector.load %arg3[%c1_13, %c0_14, %c0_15] : memref<4x4x256xf32, #tpu.memory_space<vmem>>, vector<1x4x256xf32>
    %21 = vector.shape_cast %20 : vector<1x4x256xf32> to vector<4x256xf32>
    %c0_16 = arith.constant 0 : index
    %c1_17 = arith.constant 1 : index
    %c0_18 = arith.constant 0 : index
    %22 = vector.load %arg4[%c0_16, %c1_17, %c0_18] : memref<8x4x256xf32, #tpu.memory_space<vmem>>, vector<1x1x256xf32>
    %23 = vector.shape_cast %22 : vector<1x1x256xf32> to vector<1x256xf32>
    %c0_19 = arith.constant 0 : index
    %c1_20 = arith.constant 1 : index
    %c0_21 = arith.constant 0 : index
    %24 = vector.load %arg5[%c0_19, %c1_20, %c0_21] : memref<8x4x256xf32, #tpu.memory_space<vmem>>, vector<1x1x256xf32>
    %25 = vector.shape_cast %24 : vector<1x1x256xf32> to vector<1x256xf32>
    %26 = vector.broadcast %23 : vector<1x256xf32> to vector<4x256xf32>
    %27 = arith.mulf %19, %26 : vector<4x256xf32>
    %28 = vector.broadcast %25 : vector<1x256xf32> to vector<4x256xf32>
    %29 = arith.mulf %21, %28 : vector<4x256xf32>
    %30 = arith.subf %27, %29 : vector<4x256xf32>
    %31 = arith.addf %12, %30 : vector<4x256xf32>
    %32 = vector.broadcast %25 : vector<1x256xf32> to vector<4x256xf32>
    %33 = arith.mulf %19, %32 : vector<4x256xf32>
    %34 = vector.broadcast %23 : vector<1x256xf32> to vector<4x256xf32>
    %35 = arith.mulf %21, %34 : vector<4x256xf32>
    %36 = arith.addf %33, %35 : vector<4x256xf32>
    %37 = arith.addf %17, %36 : vector<4x256xf32>
    %c2 = arith.constant 2 : index
    %c0_22 = arith.constant 0 : index
    %c0_23 = arith.constant 0 : index
    %38 = vector.load %arg2[%c2, %c0_22, %c0_23] : memref<4x4x256xf32, #tpu.memory_space<vmem>>, vector<1x4x256xf32>
    %39 = vector.shape_cast %38 : vector<1x4x256xf32> to vector<4x256xf32>
    %c2_24 = arith.constant 2 : index
    %c0_25 = arith.constant 0 : index
    %c0_26 = arith.constant 0 : index
    %40 = vector.load %arg3[%c2_24, %c0_25, %c0_26] : memref<4x4x256xf32, #tpu.memory_space<vmem>>, vector<1x4x256xf32>
    %41 = vector.shape_cast %40 : vector<1x4x256xf32> to vector<4x256xf32>
    %c0_27 = arith.constant 0 : index
    %c2_28 = arith.constant 2 : index
    %c0_29 = arith.constant 0 : index
    %42 = vector.load %arg4[%c0_27, %c2_28, %c0_29] : memref<8x4x256xf32, #tpu.memory_space<vmem>>, vector<1x1x256xf32>
    %43 = vector.shape_cast %42 : vector<1x1x256xf32> to vector<1x256xf32>
    %c0_30 = arith.constant 0 : index
    %c2_31 = arith.constant 2 : index
    %c0_32 = arith.constant 0 : index
    %44 = vector.load %arg5[%c0_30, %c2_31, %c0_32] : memref<8x4x256xf32, #tpu.memory_space<vmem>>, vector<1x1x256xf32>
    %45 = vector.shape_cast %44 : vector<1x1x256xf32> to vector<1x256xf32>
    %46 = vector.broadcast %43 : vector<1x256xf32> to vector<4x256xf32>
    %47 = arith.mulf %39, %46 : vector<4x256xf32>
    %48 = vector.broadcast %45 : vector<1x256xf32> to vector<4x256xf32>
    %49 = arith.mulf %41, %48 : vector<4x256xf32>
    %50 = arith.subf %47, %49 : vector<4x256xf32>
    %51 = arith.addf %31, %50 : vector<4x256xf32>
    %52 = vector.broadcast %45 : vector<1x256xf32> to vector<4x256xf32>
    %53 = arith.mulf %39, %52 : vector<4x256xf32>
    %54 = vector.broadcast %43 : vector<1x256xf32> to vector<4x256xf32>
    %55 = arith.mulf %41, %54 : vector<4x256xf32>
    %56 = arith.addf %53, %55 : vector<4x256xf32>
    %57 = arith.addf %37, %56 : vector<4x256xf32>
    %c3 = arith.constant 3 : index
    %c0_33 = arith.constant 0 : index
    %c0_34 = arith.constant 0 : index
    %58 = vector.load %arg2[%c3, %c0_33, %c0_34] : memref<4x4x256xf32, #tpu.memory_space<vmem>>, vector<1x4x256xf32>
    %59 = vector.shape_cast %58 : vector<1x4x256xf32> to vector<4x256xf32>
    %c3_35 = arith.constant 3 : index
    %c0_36 = arith.constant 0 : index
    %c0_37 = arith.constant 0 : index
    %60 = vector.load %arg3[%c3_35, %c0_36, %c0_37] : memref<4x4x256xf32, #tpu.memory_space<vmem>>, vector<1x4x256xf32>
    %61 = vector.shape_cast %60 : vector<1x4x256xf32> to vector<4x256xf32>
    %c0_38 = arith.constant 0 : index
    %c3_39 = arith.constant 3 : index
    %c0_40 = arith.constant 0 : index
    %62 = vector.load %arg4[%c0_38, %c3_39, %c0_40] : memref<8x4x256xf32, #tpu.memory_space<vmem>>, vector<1x1x256xf32>
    %63 = vector.shape_cast %62 : vector<1x1x256xf32> to vector<1x256xf32>
    %c0_41 = arith.constant 0 : index
    %c3_42 = arith.constant 3 : index
    %c0_43 = arith.constant 0 : index
    %64 = vector.load %arg5[%c0_41, %c3_42, %c0_43] : memref<8x4x256xf32, #tpu.memory_space<vmem>>, vector<1x1x256xf32>
    %65 = vector.shape_cast %64 : vector<1x1x256xf32> to vector<1x256xf32>
    %66 = vector.broadcast %63 : vector<1x256xf32> to vector<4x256xf32>
    %67 = arith.mulf %59, %66 : vector<4x256xf32>
    %68 = vector.broadcast %65 : vector<1x256xf32> to vector<4x256xf32>
    %69 = arith.mulf %61, %68 : vector<4x256xf32>
    %70 = arith.subf %67, %69 : vector<4x256xf32>
    %71 = arith.addf %51, %70 : vector<4x256xf32>
    %72 = vector.broadcast %65 : vector<1x256xf32> to vector<4x256xf32>
    %73 = arith.mulf %59, %72 : vector<4x256xf32>
    %74 = vector.broadcast %63 : vector<1x256xf32> to vector<4x256xf32>
    %75 = arith.mulf %61, %74 : vector<4x256xf32>
    %76 = arith.addf %73, %75 : vector<4x256xf32>
    %77 = arith.addf %57, %76 : vector<4x256xf32>
    %c0_44 = arith.constant 0 : index
    %c0_45 = arith.constant 0 : index
    %c0_46 = arith.constant 0 : index
    %78 = vector.load %arg6[%c0_44, %c0_45, %c0_46] : memref<8x4x256xf32, #tpu.memory_space<vmem>>, vector<1x4x256xf32>
    %79 = vector.shape_cast %78 : vector<1x4x256xf32> to vector<4x256xf32>
    %80 = vector.shape_cast %71 : vector<4x256xf32> to vector<1x4x256xf32>
    tpu.vector_store %arg6[%c0_44, %c0_45, %c0_46], %80 {strides = array<i32>} : memref<8x4x256xf32, #tpu.memory_space<vmem>>, vector<1x4x256xf32>,
    %c0_47 = arith.constant 0 : index
    %c0_48 = arith.constant 0 : index
    %c0_49 = arith.constant 0 : index
    %81 = vector.load %arg7[%c0_47, %c0_48, %c0_49] : memref<8x4x256xf32, #tpu.memory_space<vmem>>, vector<1x4x256xf32>
    %82 = vector.shape_cast %81 : vector<1x4x256xf32> to vector<4x256xf32>
    %83 = vector.shape_cast %77 : vector<4x256xf32> to vector<1x4x256xf32>
    tpu.vector_store %arg7[%c0_47, %c0_48, %c0_49], %83 {strides = array<i32>} : memref<8x4x256xf32, #tpu.memory_space<vmem>>, vector<1x4x256xf32>,
    %c0_50 = arith.constant 0 : index
    %c0_51 = arith.constant 0 : index
    %c0_52 = arith.constant 0 : index
    %84 = vector.load %arg2[%c0_50, %c0_51, %c0_52] : memref<4x4x256xf32, #tpu.memory_space<vmem>>, vector<1x4x256xf32>
    %85 = vector.shape_cast %84 : vector<1x4x256xf32> to vector<4x256xf32>
    %c0_53 = arith.constant 0 : index
    %c0_54 = arith.constant 0 : index
    %c0_55 = arith.constant 0 : index
    %86 = vector.load %arg3[%c0_53, %c0_54, %c0_55] : memref<4x4x256xf32, #tpu.memory_space<vmem>>, vector<1x4x256xf32>
    %87 = vector.shape_cast %86 : vector<1x4x256xf32> to vector<4x256xf32>
    %c1_56 = arith.constant 1 : index
    %c0_57 = arith.constant 0 : index
    %c0_58 = arith.constant 0 : index
    %88 = vector.load %arg4[%c1_56, %c0_57, %c0_58] : memref<8x4x256xf32, #tpu.memory_space<vmem>>, vector<1x1x256xf32>
    %89 = vector.shape_cast %88 : vector<1x1x256xf32> to vector<1x256xf32>
    %c1_59 = arith.constant 1 : index
    %c0_60 = arith.constant 0 : index
    %c0_61 = arith.constant 0 : index
    %90 = vector.load %arg5[%c1_59, %c0_60, %c0_61] : memref<8x4x256xf32, #tpu.memory_space<vmem>>, vector<1x1x256xf32>
    %91 = vector.shape_cast %90 : vector<1x1x256xf32> to vector<1x256xf32>
    %92 = vector.broadcast %89 : vector<1x256xf32> to vector<4x256xf32>
    %93 = arith.mulf %85, %92 : vector<4x256xf32>
    %94 = vector.broadcast %91 : vector<1x256xf32> to vector<4x256xf32>
    %95 = arith.mulf %87, %94 : vector<4x256xf32>
    %96 = arith.subf %93, %95 : vector<4x256xf32>
    %97 = vector.broadcast %91 : vector<1x256xf32> to vector<4x256xf32>
    %98 = arith.mulf %85, %97 : vector<4x256xf32>
    %99 = vector.broadcast %89 : vector<1x256xf32> to vector<4x256xf32>
    %100 = arith.mulf %87, %99 : vector<4x256xf32>
    %101 = arith.addf %98, %100 : vector<4x256xf32>
    %c1_62 = arith.constant 1 : index
    %c0_63 = arith.constant 0 : index
    %c0_64 = arith.constant 0 : index
    %102 = vector.load %arg2[%c1_62, %c0_63, %c0_64] : memref<4x4x256xf32, #tpu.memory_space<vmem>>, vector<1x4x256xf32>
    %103 = vector.shape_cast %102 : vector<1x4x256xf32> to vector<4x256xf32>
    %c1_65 = arith.constant 1 : index
    %c0_66 = arith.constant 0 : index
    %c0_67 = arith.constant 0 : index
    %104 = vector.load %arg3[%c1_65, %c0_66, %c0_67] : memref<4x4x256xf32, #tpu.memory_space<vmem>>, vector<1x4x256xf32>
    %105 = vector.shape_cast %104 : vector<1x4x256xf32> to vector<4x256xf32>
    %c1_68 = arith.constant 1 : index
    %c1_69 = arith.constant 1 : index
    %c0_70 = arith.constant 0 : index
    %106 = vector.load %arg4[%c1_68, %c1_69, %c0_70] : memref<8x4x256xf32, #tpu.memory_space<vmem>>, vector<1x1x256xf32>
    %107 = vector.shape_cast %106 : vector<1x1x256xf32> to vector<1x256xf32>
    %c1_71 = arith.constant 1 : index
    %c1_72 = arith.constant 1 : index
    %c0_73 = arith.constant 0 : index
    %108 = vector.load %arg5[%c1_71, %c1_72, %c0_73] : memref<8x4x256xf32, #tpu.memory_space<vmem>>, vector<1x1x256xf32>
    %109 = vector.shape_cast %108 : vector<1x1x256xf32> to vector<1x256xf32>
    %110 = vector.broadcast %107 : vector<1x256xf32> to vector<4x256xf32>
    %111 = arith.mulf %103, %110 : vector<4x256xf32>
    %112 = vector.broadcast %109 : vector<1x256xf32> to vector<4x256xf32>
    %113 = arith.mulf %105, %112 : vector<4x256xf32>
    %114 = arith.subf %111, %113 : vector<4x256xf32>
    %115 = arith.addf %96, %114 : vector<4x256xf32>
    %116 = vector.broadcast %109 : vector<1x256xf32> to vector<4x256xf32>
    %117 = arith.mulf %103, %116 : vector<4x256xf32>
    %118 = vector.broadcast %107 : vector<1x256xf32> to vector<4x256xf32>
    %119 = arith.mulf %105, %118 : vector<4x256xf32>
    %120 = arith.addf %117, %119 : vector<4x256xf32>
    %121 = arith.addf %101, %120 : vector<4x256xf32>
    %c2_74 = arith.constant 2 : index
    %c0_75 = arith.constant 0 : index
    %c0_76 = arith.constant 0 : index
    %122 = vector.load %arg2[%c2_74, %c0_75, %c0_76] : memref<4x4x256xf32, #tpu.memory_space<vmem>>, vector<1x4x256xf32>
    %123 = vector.shape_cast %122 : vector<1x4x256xf32> to vector<4x256xf32>
    %c2_77 = arith.constant 2 : index
    %c0_78 = arith.constant 0 : index
    %c0_79 = arith.constant 0 : index
    %124 = vector.load %arg3[%c2_77, %c0_78, %c0_79] : memref<4x4x256xf32, #tpu.memory_space<vmem>>, vector<1x4x256xf32>
    %125 = vector.shape_cast %124 : vector<1x4x256xf32> to vector<4x256xf32>
    %c1_80 = arith.constant 1 : index
    %c2_81 = arith.constant 2 : index
    %c0_82 = arith.constant 0 : index
    %126 = vector.load %arg4[%c1_80, %c2_81, %c0_82] : memref<8x4x256xf32, #tpu.memory_space<vmem>>, vector<1x1x256xf32>
    %127 = vector.shape_cast %126 : vector<1x1x256xf32> to vector<1x256xf32>
    %c1_83 = arith.constant 1 : index
    %c2_84 = arith.constant 2 : index
    %c0_85 = arith.constant 0 : index
    %128 = vector.load %arg5[%c1_83, %c2_84, %c0_85] : memref<8x4x256xf32, #tpu.memory_space<vmem>>, vector<1x1x256xf32>
    %129 = vector.shape_cast %128 : vector<1x1x256xf32> to vector<1x256xf32>
    %130 = vector.broadcast %127 : vector<1x256xf32> to vector<4x256xf32>
    %131 = arith.mulf %123, %130 : vector<4x256xf32>
    %132 = vector.broadcast %129 : vector<1x256xf32> to vector<4x256xf32>
    %133 = arith.mulf %125, %132 : vector<4x256xf32>
    %134 = arith.subf %131, %133 : vector<4x256xf32>
    %135 = arith.addf %115, %134 : vector<4x256xf32>
    %136 = vector.broadcast %129 : vector<1x256xf32> to vector<4x256xf32>
    %137 = arith.mulf %123, %136 : vector<4x256xf32>
    %138 = vector.broadcast %127 : vector<1x256xf32> to vector<4x256xf32>
    %139 = arith.mulf %125, %138 : vector<4x256xf32>
    %140 = arith.addf %137, %139 : vector<4x256xf32>
    %141 = arith.addf %121, %140 : vector<4x256xf32>
    %c3_86 = arith.constant 3 : index
    %c0_87 = arith.constant 0 : index
    %c0_88 = arith.constant 0 : index
    %142 = vector.load %arg2[%c3_86, %c0_87, %c0_88] : memref<4x4x256xf32, #tpu.memory_space<vmem>>, vector<1x4x256xf32>
    %143 = vector.shape_cast %142 : vector<1x4x256xf32> to vector<4x256xf32>
    %c3_89 = arith.constant 3 : index
    %c0_90 = arith.constant 0 : index
    %c0_91 = arith.constant 0 : index
    %144 = vector.load %arg3[%c3_89, %c0_90, %c0_91] : memref<4x4x256xf32, #tpu.memory_space<vmem>>, vector<1x4x256xf32>
    %145 = vector.shape_cast %144 : vector<1x4x256xf32> to vector<4x256xf32>
    %c1_92 = arith.constant 1 : index
    %c3_93 = arith.constant 3 : index
    %c0_94 = arith.constant 0 : index
    %146 = vector.load %arg4[%c1_92, %c3_93, %c0_94] : memref<8x4x256xf32, #tpu.memory_space<vmem>>, vector<1x1x256xf32>
    %147 = vector.shape_cast %146 : vector<1x1x256xf32> to vector<1x256xf32>
    %c1_95 = arith.constant 1 : index
    %c3_96 = arith.constant 3 : index
    %c0_97 = arith.constant 0 : index
    %148 = vector.load %arg5[%c1_95, %c3_96, %c0_97] : memref<8x4x256xf32, #tpu.memory_space<vmem>>, vector<1x1x256xf32>
    %149 = vector.shape_cast %148 : vector<1x1x256xf32> to vector<1x256xf32>
    %150 = vector.broadcast %147 : vector<1x256xf32> to vector<4x256xf32>
    %151 = arith.mulf %143, %150 : vector<4x256xf32>
    %152 = vector.broadcast %149 : vector<1x256xf32> to vector<4x256xf32>
    %153 = arith.mulf %145, %152 : vector<4x256xf32>
    %154 = arith.subf %151, %153 : vector<4x256xf32>
    %155 = arith.addf %135, %154 : vector<4x256xf32>
    %156 = vector.broadcast %149 : vector<1x256xf32> to vector<4x256xf32>
    %157 = arith.mulf %143, %156 : vector<4x256xf32>
    %158 = vector.broadcast %147 : vector<1x256xf32> to vector<4x256xf32>
    %159 = arith.mulf %145, %158 : vector<4x256xf32>
    %160 = arith.addf %157, %159 : vector<4x256xf32>
    %161 = arith.addf %141, %160 : vector<4x256xf32>
    %c1_98 = arith.constant 1 : index
    %c0_99 = arith.constant 0 : index
    %c0_100 = arith.constant 0 : index
    %162 = vector.load %arg6[%c1_98, %c0_99, %c0_100] : memref<8x4x256xf32, #tpu.memory_space<vmem>>, vector<1x4x256xf32>
    %163 = vector.shape_cast %162 : vector<1x4x256xf32> to vector<4x256xf32>
    %164 = vector.shape_cast %155 : vector<4x256xf32> to vector<1x4x256xf32>
    tpu.vector_store %arg6[%c1_98, %c0_99, %c0_100], %164 {strides = array<i32>} : memref<8x4x256xf32, #tpu.memory_space<vmem>>, vector<1x4x256xf32>,
    %c1_101 = arith.constant 1 : index
    %c0_102 = arith.constant 0 : index
    %c0_103 = arith.constant 0 : index
    %165 = vector.load %arg7[%c1_101, %c0_102, %c0_103] : memref<8x4x256xf32, #tpu.memory_space<vmem>>, vector<1x4x256xf32>
    %166 = vector.shape_cast %165 : vector<1x4x256xf32> to vector<4x256xf32>
    %167 = vector.shape_cast %161 : vector<4x256xf32> to vector<1x4x256xf32>
    tpu.vector_store %arg7[%c1_101, %c0_102, %c0_103], %167 {strides = array<i32>} : memref<8x4x256xf32, #tpu.memory_space<vmem>>, vector<1x4x256xf32>,
    %c0_104 = arith.constant 0 : index
    %c0_105 = arith.constant 0 : index
    %c0_106 = arith.constant 0 : index
    %168 = vector.load %arg2[%c0_104, %c0_105, %c0_106] : memref<4x4x256xf32, #tpu.memory_space<vmem>>, vector<1x4x256xf32>
    %169 = vector.shape_cast %168 : vector<1x4x256xf32> to vector<4x256xf32>
    %c0_107 = arith.constant 0 : index
    %c0_108 = arith.constant 0 : index
    %c0_109 = arith.constant 0 : index
    %170 = vector.load %arg3[%c0_107, %c0_108, %c0_109] : memref<4x4x256xf32, #tpu.memory_space<vmem>>, vector<1x4x256xf32>
    %171 = vector.shape_cast %170 : vector<1x4x256xf32> to vector<4x256xf32>
    %c2_110 = arith.constant 2 : index
    %c0_111 = arith.constant 0 : index
    %c0_112 = arith.constant 0 : index
    %172 = vector.load %arg4[%c2_110, %c0_111, %c0_112] : memref<8x4x256xf32, #tpu.memory_space<vmem>>, vector<1x1x256xf32>
    %173 = vector.shape_cast %172 : vector<1x1x256xf32> to vector<1x256xf32>
    %c2_113 = arith.constant 2 : index
    %c0_114 = arith.constant 0 : index
    %c0_115 = arith.constant 0 : index
    %174 = vector.load %arg5[%c2_113, %c0_114, %c0_115] : memref<8x4x256xf32, #tpu.memory_space<vmem>>, vector<1x1x256xf32>
    %175 = vector.shape_cast %174 : vector<1x1x256xf32> to vector<1x256xf32>
    %176 = vector.broadcast %173 : vector<1x256xf32> to vector<4x256xf32>
    %177 = arith.mulf %169, %176 : vector<4x256xf32>
    %178 = vector.broadcast %175 : vector<1x256xf32> to vector<4x256xf32>
    %179 = arith.mulf %171, %178 : vector<4x256xf32>
    %180 = arith.subf %177, %179 : vector<4x256xf32>
    %181 = vector.broadcast %175 : vector<1x256xf32> to vector<4x256xf32>
    %182 = arith.mulf %169, %181 : vector<4x256xf32>
    %183 = vector.broadcast %173 : vector<1x256xf32> to vector<4x256xf32>
    %184 = arith.mulf %171, %183 : vector<4x256xf32>
    %185 = arith.addf %182, %184 : vector<4x256xf32>
    %c1_116 = arith.constant 1 : index
    %c0_117 = arith.constant 0 : index
    %c0_118 = arith.constant 0 : index
    %186 = vector.load %arg2[%c1_116, %c0_117, %c0_118] : memref<4x4x256xf32, #tpu.memory_space<vmem>>, vector<1x4x256xf32>
    %187 = vector.shape_cast %186 : vector<1x4x256xf32> to vector<4x256xf32>
    %c1_119 = arith.constant 1 : index
    %c0_120 = arith.constant 0 : index
    %c0_121 = arith.constant 0 : index
    %188 = vector.load %arg3[%c1_119, %c0_120, %c0_121] : memref<4x4x256xf32, #tpu.memory_space<vmem>>, vector<1x4x256xf32>
    %189 = vector.shape_cast %188 : vector<1x4x256xf32> to vector<4x256xf32>
    %c2_122 = arith.constant 2 : index
    %c1_123 = arith.constant 1 : index
    %c0_124 = arith.constant 0 : index
    %190 = vector.load %arg4[%c2_122, %c1_123, %c0_124] : memref<8x4x256xf32, #tpu.memory_space<vmem>>, vector<1x1x256xf32>
    %191 = vector.shape_cast %190 : vector<1x1x256xf32> to vector<1x256xf32>
    %c2_125 = arith.constant 2 : index
    %c1_126 = arith.constant 1 : index
    %c0_127 = arith.constant 0 : index
    %192 = vector.load %arg5[%c2_125, %c1_126, %c0_127] : memref<8x4x256xf32, #tpu.memory_space<vmem>>, vector<1x1x256xf32>
    %193 = vector.shape_cast %192 : vector<1x1x256xf32> to vector<1x256xf32>
    %194 = vector.broadcast %191 : vector<1x256xf32> to vector<4x256xf32>
    %195 = arith.mulf %187, %194 : vector<4x256xf32>
    %196 = vector.broadcast %193 : vector<1x256xf32> to vector<4x256xf32>
    %197 = arith.mulf %189, %196 : vector<4x256xf32>
    %198 = arith.subf %195, %197 : vector<4x256xf32>
    %199 = arith.addf %180, %198 : vector<4x256xf32>
    %200 = vector.broadcast %193 : vector<1x256xf32> to vector<4x256xf32>
    %201 = arith.mulf %187, %200 : vector<4x256xf32>
    %202 = vector.broadcast %191 : vector<1x256xf32> to vector<4x256xf32>
    %203 = arith.mulf %189, %202 : vector<4x256xf32>
    %204 = arith.addf %201, %203 : vector<4x256xf32>
    %205 = arith.addf %185, %204 : vector<4x256xf32>
    %c2_128 = arith.constant 2 : index
    %c0_129 = arith.constant 0 : index
    %c0_130 = arith.constant 0 : index
    %206 = vector.load %arg2[%c2_128, %c0_129, %c0_130] : memref<4x4x256xf32, #tpu.memory_space<vmem>>, vector<1x4x256xf32>
    %207 = vector.shape_cast %206 : vector<1x4x256xf32> to vector<4x256xf32>
    %c2_131 = arith.constant 2 : index
    %c0_132 = arith.constant 0 : index
    %c0_133 = arith.constant 0 : index
    %208 = vector.load %arg3[%c2_131, %c0_132, %c0_133] : memref<4x4x256xf32, #tpu.memory_space<vmem>>, vector<1x4x256xf32>
    %209 = vector.shape_cast %208 : vector<1x4x256xf32> to vector<4x256xf32>
    %c2_134 = arith.constant 2 : index
    %c2_135 = arith.constant 2 : index
    %c0_136 = arith.constant 0 : index
    %210 = vector.load %arg4[%c2_134, %c2_135, %c0_136] : memref<8x4x256xf32, #tpu.memory_space<vmem>>, vector<1x1x256xf32>
    %211 = vector.shape_cast %210 : vector<1x1x256xf32> to vector<1x256xf32>
    %c2_137 = arith.constant 2 : index
    %c2_138 = arith.constant 2 : index
    %c0_139 = arith.constant 0 : index
    %212 = vector.load %arg5[%c2_137, %c2_138, %c0_139] : memref<8x4x256xf32, #tpu.memory_space<vmem>>, vector<1x1x256xf32>
    %213 = vector.shape_cast %212 : vector<1x1x256xf32> to vector<1x256xf32>
    %214 = vector.broadcast %211 : vector<1x256xf32> to vector<4x256xf32>
    %215 = arith.mulf %207, %214 : vector<4x256xf32>
    %216 = vector.broadcast %213 : vector<1x256xf32> to vector<4x256xf32>
    %217 = arith.mulf %209, %216 : vector<4x256xf32>
    %218 = arith.subf %215, %217 : vector<4x256xf32>
    %219 = arith.addf %199, %218 : vector<4x256xf32>
    %220 = vector.broadcast %213 : vector<1x256xf32> to vector<4x256xf32>
    %221 = arith.mulf %207, %220 : vector<4x256xf32>
    %222 = vector.broadcast %211 : vector<1x256xf32> to vector<4x256xf32>
    %223 = arith.mulf %209, %222 : vector<4x256xf32>
    %224 = arith.addf %221, %223 : vector<4x256xf32>
    %225 = arith.addf %205, %224 : vector<4x256xf32>
    %c3_140 = arith.constant 3 : index
    %c0_141 = arith.constant 0 : index
    %c0_142 = arith.constant 0 : index
    %226 = vector.load %arg2[%c3_140, %c0_141, %c0_142] : memref<4x4x256xf32, #tpu.memory_space<vmem>>, vector<1x4x256xf32>
    %227 = vector.shape_cast %226 : vector<1x4x256xf32> to vector<4x256xf32>
    %c3_143 = arith.constant 3 : index
    %c0_144 = arith.constant 0 : index
    %c0_145 = arith.constant 0 : index
    %228 = vector.load %arg3[%c3_143, %c0_144, %c0_145] : memref<4x4x256xf32, #tpu.memory_space<vmem>>, vector<1x4x256xf32>
    %229 = vector.shape_cast %228 : vector<1x4x256xf32> to vector<4x256xf32>
    %c2_146 = arith.constant 2 : index
    %c3_147 = arith.constant 3 : index
    %c0_148 = arith.constant 0 : index
    %230 = vector.load %arg4[%c2_146, %c3_147, %c0_148] : memref<8x4x256xf32, #tpu.memory_space<vmem>>, vector<1x1x256xf32>
    %231 = vector.shape_cast %230 : vector<1x1x256xf32> to vector<1x256xf32>
    %c2_149 = arith.constant 2 : index
    %c3_150 = arith.constant 3 : index
    %c0_151 = arith.constant 0 : index
    %232 = vector.load %arg5[%c2_149, %c3_150, %c0_151] : memref<8x4x256xf32, #tpu.memory_space<vmem>>, vector<1x1x256xf32>
    %233 = vector.shape_cast %232 : vector<1x1x256xf32> to vector<1x256xf32>
    %234 = vector.broadcast %231 : vector<1x256xf32> to vector<4x256xf32>
    %235 = arith.mulf %227, %234 : vector<4x256xf32>
    %236 = vector.broadcast %233 : vector<1x256xf32> to vector<4x256xf32>
    %237 = arith.mulf %229, %236 : vector<4x256xf32>
    %238 = arith.subf %235, %237 : vector<4x256xf32>
    %239 = arith.addf %219, %238 : vector<4x256xf32>
    %240 = vector.broadcast %233 : vector<1x256xf32> to vector<4x256xf32>
    %241 = arith.mulf %227, %240 : vector<4x256xf32>
    %242 = vector.broadcast %231 : vector<1x256xf32> to vector<4x256xf32>
    %243 = arith.mulf %229, %242 : vector<4x256xf32>
    %244 = arith.addf %241, %243 : vector<4x256xf32>
    %245 = arith.addf %225, %244 : vector<4x256xf32>
    %c2_152 = arith.constant 2 : index
    %c0_153 = arith.constant 0 : index
    %c0_154 = arith.constant 0 : index
    %246 = vector.load %arg6[%c2_152, %c0_153, %c0_154] : memref<8x4x256xf32, #tpu.memory_space<vmem>>, vector<1x4x256xf32>
    %247 = vector.shape_cast %246 : vector<1x4x256xf32> to vector<4x256xf32>
    %248 = vector.shape_cast %239 : vector<4x256xf32> to vector<1x4x256xf32>
    tpu.vector_store %arg6[%c2_152, %c0_153, %c0_154], %248 {strides = array<i32>} : memref<8x4x256xf32, #tpu.memory_space<vmem>>, vector<1x4x256xf32>,
    %c2_155 = arith.constant 2 : index
    %c0_156 = arith.constant 0 : index
    %c0_157 = arith.constant 0 : index
    %249 = vector.load %arg7[%c2_155, %c0_156, %c0_157] : memref<8x4x256xf32, #tpu.memory_space<vmem>>, vector<1x4x256xf32>
    %250 = vector.shape_cast %249 : vector<1x4x256xf32> to vector<4x256xf32>
    %251 = vector.shape_cast %245 : vector<4x256xf32> to vector<1x4x256xf32>
    tpu.vector_store %arg7[%c2_155, %c0_156, %c0_157], %251 {strides = array<i32>} : memref<8x4x256xf32, #tpu.memory_space<vmem>>, vector<1x4x256xf32>,
    %c0_158 = arith.constant 0 : index
    %c0_159 = arith.constant 0 : index
    %c0_160 = arith.constant 0 : index
    %252 = vector.load %arg2[%c0_158, %c0_159, %c0_160] : memref<4x4x256xf32, #tpu.memory_space<vmem>>, vector<1x4x256xf32>
    %253 = vector.shape_cast %252 : vector<1x4x256xf32> to vector<4x256xf32>
    %c0_161 = arith.constant 0 : index
    %c0_162 = arith.constant 0 : index
    %c0_163 = arith.constant 0 : index
    %254 = vector.load %arg3[%c0_161, %c0_162, %c0_163] : memref<4x4x256xf32, #tpu.memory_space<vmem>>, vector<1x4x256xf32>
    %255 = vector.shape_cast %254 : vector<1x4x256xf32> to vector<4x256xf32>
    %c3_164 = arith.constant 3 : index
    %c0_165 = arith.constant 0 : index
    %c0_166 = arith.constant 0 : index
    %256 = vector.load %arg4[%c3_164, %c0_165, %c0_166] : memref<8x4x256xf32, #tpu.memory_space<vmem>>, vector<1x1x256xf32>
    %257 = vector.shape_cast %256 : vector<1x1x256xf32> to vector<1x256xf32>
    %c3_167 = arith.constant 3 : index
    %c0_168 = arith.constant 0 : index
    %c0_169 = arith.constant 0 : index
    %258 = vector.load %arg5[%c3_167, %c0_168, %c0_169] : memref<8x4x256xf32, #tpu.memory_space<vmem>>, vector<1x1x256xf32>
    %259 = vector.shape_cast %258 : vector<1x1x256xf32> to vector<1x256xf32>
    %260 = vector.broadcast %257 : vector<1x256xf32> to vector<4x256xf32>
    %261 = arith.mulf %253, %260 : vector<4x256xf32>
    %262 = vector.broadcast %259 : vector<1x256xf32> to vector<4x256xf32>
    %263 = arith.mulf %255, %262 : vector<4x256xf32>
    %264 = arith.subf %261, %263 : vector<4x256xf32>
    %265 = vector.broadcast %259 : vector<1x256xf32> to vector<4x256xf32>
    %266 = arith.mulf %253, %265 : vector<4x256xf32>
    %267 = vector.broadcast %257 : vector<1x256xf32> to vector<4x256xf32>
    %268 = arith.mulf %255, %267 : vector<4x256xf32>
    %269 = arith.addf %266, %268 : vector<4x256xf32>
    %c1_170 = arith.constant 1 : index
    %c0_171 = arith.constant 0 : index
    %c0_172 = arith.constant 0 : index
    %270 = vector.load %arg2[%c1_170, %c0_171, %c0_172] : memref<4x4x256xf32, #tpu.memory_space<vmem>>, vector<1x4x256xf32>
    %271 = vector.shape_cast %270 : vector<1x4x256xf32> to vector<4x256xf32>
    %c1_173 = arith.constant 1 : index
    %c0_174 = arith.constant 0 : index
    %c0_175 = arith.constant 0 : index
    %272 = vector.load %arg3[%c1_173, %c0_174, %c0_175] : memref<4x4x256xf32, #tpu.memory_space<vmem>>, vector<1x4x256xf32>
    %273 = vector.shape_cast %272 : vector<1x4x256xf32> to vector<4x256xf32>
    %c3_176 = arith.constant 3 : index
    %c1_177 = arith.constant 1 : index
    %c0_178 = arith.constant 0 : index
    %274 = vector.load %arg4[%c3_176, %c1_177, %c0_178] : memref<8x4x256xf32, #tpu.memory_space<vmem>>, vector<1x1x256xf32>
    %275 = vector.shape_cast %274 : vector<1x1x256xf32> to vector<1x256xf32>
    %c3_179 = arith.constant 3 : index
    %c1_180 = arith.constant 1 : index
    %c0_181 = arith.constant 0 : index
    %276 = vector.load %arg5[%c3_179, %c1_180, %c0_181] : memref<8x4x256xf32, #tpu.memory_space<vmem>>, vector<1x1x256xf32>
    %277 = vector.shape_cast %276 : vector<1x1x256xf32> to vector<1x256xf32>
    %278 = vector.broadcast %275 : vector<1x256xf32> to vector<4x256xf32>
    %279 = arith.mulf %271, %278 : vector<4x256xf32>
    %280 = vector.broadcast %277 : vector<1x256xf32> to vector<4x256xf32>
    %281 = arith.mulf %273, %280 : vector<4x256xf32>
    %282 = arith.subf %279, %281 : vector<4x256xf32>
    %283 = arith.addf %264, %282 : vector<4x256xf32>
    %284 = vector.broadcast %277 : vector<1x256xf32> to vector<4x256xf32>
    %285 = arith.mulf %271, %284 : vector<4x256xf32>
    %286 = vector.broadcast %275 : vector<1x256xf32> to vector<4x256xf32>
    %287 = arith.mulf %273, %286 : vector<4x256xf32>
    %288 = arith.addf %285, %287 : vector<4x256xf32>
    %289 = arith.addf %269, %288 : vector<4x256xf32>
    %c2_182 = arith.constant 2 : index
    %c0_183 = arith.constant 0 : index
    %c0_184 = arith.constant 0 : index
    %290 = vector.load %arg2[%c2_182, %c0_183, %c0_184] : memref<4x4x256xf32, #tpu.memory_space<vmem>>, vector<1x4x256xf32>
    %291 = vector.shape_cast %290 : vector<1x4x256xf32> to vector<4x256xf32>
    %c2_185 = arith.constant 2 : index
    %c0_186 = arith.constant 0 : index
    %c0_187 = arith.constant 0 : index
    %292 = vector.load %arg3[%c2_185, %c0_186, %c0_187] : memref<4x4x256xf32, #tpu.memory_space<vmem>>, vector<1x4x256xf32>
    %293 = vector.shape_cast %292 : vector<1x4x256xf32> to vector<4x256xf32>
    %c3_188 = arith.constant 3 : index
    %c2_189 = arith.constant 2 : index
    %c0_190 = arith.constant 0 : index
    %294 = vector.load %arg4[%c3_188, %c2_189, %c0_190] : memref<8x4x256xf32, #tpu.memory_space<vmem>>, vector<1x1x256xf32>
    %295 = vector.shape_cast %294 : vector<1x1x256xf32> to vector<1x256xf32>
    %c3_191 = arith.constant 3 : index
    %c2_192 = arith.constant 2 : index
    %c0_193 = arith.constant 0 : index
    %296 = vector.load %arg5[%c3_191, %c2_192, %c0_193] : memref<8x4x256xf32, #tpu.memory_space<vmem>>, vector<1x1x256xf32>
    %297 = vector.shape_cast %296 : vector<1x1x256xf32> to vector<1x256xf32>
    %298 = vector.broadcast %295 : vector<1x256xf32> to vector<4x256xf32>
    %299 = arith.mulf %291, %298 : vector<4x256xf32>
    %300 = vector.broadcast %297 : vector<1x256xf32> to vector<4x256xf32>
    %301 = arith.mulf %293, %300 : vector<4x256xf32>
    %302 = arith.subf %299, %301 : vector<4x256xf32>
    %303 = arith.addf %283, %302 : vector<4x256xf32>
    %304 = vector.broadcast %297 : vector<1x256xf32> to vector<4x256xf32>
    %305 = arith.mulf %291, %304 : vector<4x256xf32>
    %306 = vector.broadcast %295 : vector<1x256xf32> to vector<4x256xf32>
    %307 = arith.mulf %293, %306 : vector<4x256xf32>
    %308 = arith.addf %305, %307 : vector<4x256xf32>
    %309 = arith.addf %289, %308 : vector<4x256xf32>
    %c3_194 = arith.constant 3 : index
    %c0_195 = arith.constant 0 : index
    %c0_196 = arith.constant 0 : index
    %310 = vector.load %arg2[%c3_194, %c0_195, %c0_196] : memref<4x4x256xf32, #tpu.memory_space<vmem>>, vector<1x4x256xf32>
    %311 = vector.shape_cast %310 : vector<1x4x256xf32> to vector<4x256xf32>
    %c3_197 = arith.constant 3 : index
    %c0_198 = arith.constant 0 : index
    %c0_199 = arith.constant 0 : index
    %312 = vector.load %arg3[%c3_197, %c0_198, %c0_199] : memref<4x4x256xf32, #tpu.memory_space<vmem>>, vector<1x4x256xf32>
    %313 = vector.shape_cast %312 : vector<1x4x256xf32> to vector<4x256xf32>
    %c3_200 = arith.constant 3 : index
    %c3_201 = arith.constant 3 : index
    %c0_202 = arith.constant 0 : index
    %314 = vector.load %arg4[%c3_200, %c3_201, %c0_202] : memref<8x4x256xf32, #tpu.memory_space<vmem>>, vector<1x1x256xf32>
    %315 = vector.shape_cast %314 : vector<1x1x256xf32> to vector<1x256xf32>
    %c3_203 = arith.constant 3 : index
    %c3_204 = arith.constant 3 : index
    %c0_205 = arith.constant 0 : index
    %316 = vector.load %arg5[%c3_203, %c3_204, %c0_205] : memref<8x4x256xf32, #tpu.memory_space<vmem>>, vector<1x1x256xf32>
    %317 = vector.shape_cast %316 : vector<1x1x256xf32> to vector<1x256xf32>
    %318 = vector.broadcast %315 : vector<1x256xf32> to vector<4x256xf32>
    %319 = arith.mulf %311, %318 : vector<4x256xf32>
    %320 = vector.broadcast %317 : vector<1x256xf32> to vector<4x256xf32>
    %321 = arith.mulf %313, %320 : vector<4x256xf32>
    %322 = arith.subf %319, %321 : vector<4x256xf32>
    %323 = arith.addf %303, %322 : vector<4x256xf32>
    %324 = vector.broadcast %317 : vector<1x256xf32> to vector<4x256xf32>
    %325 = arith.mulf %311, %324 : vector<4x256xf32>
    %326 = vector.broadcast %315 : vector<1x256xf32> to vector<4x256xf32>
    %327 = arith.mulf %313, %326 : vector<4x256xf32>
    %328 = arith.addf %325, %327 : vector<4x256xf32>
    %329 = arith.addf %309, %328 : vector<4x256xf32>
    %c3_206 = arith.constant 3 : index
    %c0_207 = arith.constant 0 : index
    %c0_208 = arith.constant 0 : index
    %330 = vector.load %arg6[%c3_206, %c0_207, %c0_208] : memref<8x4x256xf32, #tpu.memory_space<vmem>>, vector<1x4x256xf32>
    %331 = vector.shape_cast %330 : vector<1x4x256xf32> to vector<4x256xf32>
    %332 = vector.shape_cast %323 : vector<4x256xf32> to vector<1x4x256xf32>
    tpu.vector_store %arg6[%c3_206, %c0_207, %c0_208], %332 {strides = array<i32>} : memref<8x4x256xf32, #tpu.memory_space<vmem>>, vector<1x4x256xf32>,
    %c3_209 = arith.constant 3 : index
    %c0_210 = arith.constant 0 : index
    %c0_211 = arith.constant 0 : index
    %333 = vector.load %arg7[%c3_209, %c0_210, %c0_211] : memref<8x4x256xf32, #tpu.memory_space<vmem>>, vector<1x4x256xf32>
    %334 = vector.shape_cast %333 : vector<1x4x256xf32> to vector<4x256xf32>
    %335 = vector.shape_cast %329 : vector<4x256xf32> to vector<1x4x256xf32>
    tpu.vector_store %arg7[%c3_209, %c0_210, %c0_211], %335 {strides = array<i32>} : memref<8x4x256xf32, #tpu.memory_space<vmem>>, vector<1x4x256xf32>,
    %c0_212 = arith.constant 0 : index
    %c0_213 = arith.constant 0 : index
    %c0_214 = arith.constant 0 : index
    %336 = vector.load %arg2[%c0_212, %c0_213, %c0_214] : memref<4x4x256xf32, #tpu.memory_space<vmem>>, vector<1x4x256xf32>
    %337 = vector.shape_cast %336 : vector<1x4x256xf32> to vector<4x256xf32>
    %c0_215 = arith.constant 0 : index
    %c0_216 = arith.constant 0 : index
    %c0_217 = arith.constant 0 : index
    %338 = vector.load %arg3[%c0_215, %c0_216, %c0_217] : memref<4x4x256xf32, #tpu.memory_space<vmem>>, vector<1x4x256xf32>
    %339 = vector.shape_cast %338 : vector<1x4x256xf32> to vector<4x256xf32>
    %c4 = arith.constant 4 : index
    %c0_218 = arith.constant 0 : index
    %c0_219 = arith.constant 0 : index
    %340 = vector.load %arg4[%c4, %c0_218, %c0_219] : memref<8x4x256xf32, #tpu.memory_space<vmem>>, vector<1x1x256xf32>
    %341 = vector.shape_cast %340 : vector<1x1x256xf32> to vector<1x256xf32>
    %c4_220 = arith.constant 4 : index
    %c0_221 = arith.constant 0 : index
    %c0_222 = arith.constant 0 : index
    %342 = vector.load %arg5[%c4_220, %c0_221, %c0_222] : memref<8x4x256xf32, #tpu.memory_space<vmem>>, vector<1x1x256xf32>
    %343 = vector.shape_cast %342 : vector<1x1x256xf32> to vector<1x256xf32>
    %344 = vector.broadcast %341 : vector<1x256xf32> to vector<4x256xf32>
    %345 = arith.mulf %337, %344 : vector<4x256xf32>
    %346 = vector.broadcast %343 : vector<1x256xf32> to vector<4x256xf32>
    %347 = arith.mulf %339, %346 : vector<4x256xf32>
    %348 = arith.subf %345, %347 : vector<4x256xf32>
    %349 = vector.broadcast %343 : vector<1x256xf32> to vector<4x256xf32>
    %350 = arith.mulf %337, %349 : vector<4x256xf32>
    %351 = vector.broadcast %341 : vector<1x256xf32> to vector<4x256xf32>
    %352 = arith.mulf %339, %351 : vector<4x256xf32>
    %353 = arith.addf %350, %352 : vector<4x256xf32>
    %c1_223 = arith.constant 1 : index
    %c0_224 = arith.constant 0 : index
    %c0_225 = arith.constant 0 : index
    %354 = vector.load %arg2[%c1_223, %c0_224, %c0_225] : memref<4x4x256xf32, #tpu.memory_space<vmem>>, vector<1x4x256xf32>
    %355 = vector.shape_cast %354 : vector<1x4x256xf32> to vector<4x256xf32>
    %c1_226 = arith.constant 1 : index
    %c0_227 = arith.constant 0 : index
    %c0_228 = arith.constant 0 : index
    %356 = vector.load %arg3[%c1_226, %c0_227, %c0_228] : memref<4x4x256xf32, #tpu.memory_space<vmem>>, vector<1x4x256xf32>
    %357 = vector.shape_cast %356 : vector<1x4x256xf32> to vector<4x256xf32>
    %c4_229 = arith.constant 4 : index
    %c1_230 = arith.constant 1 : index
    %c0_231 = arith.constant 0 : index
    %358 = vector.load %arg4[%c4_229, %c1_230, %c0_231] : memref<8x4x256xf32, #tpu.memory_space<vmem>>, vector<1x1x256xf32>
    %359 = vector.shape_cast %358 : vector<1x1x256xf32> to vector<1x256xf32>
    %c4_232 = arith.constant 4 : index
    %c1_233 = arith.constant 1 : index
    %c0_234 = arith.constant 0 : index
    %360 = vector.load %arg5[%c4_232, %c1_233, %c0_234] : memref<8x4x256xf32, #tpu.memory_space<vmem>>, vector<1x1x256xf32>
    %361 = vector.shape_cast %360 : vector<1x1x256xf32> to vector<1x256xf32>
    %362 = vector.broadcast %359 : vector<1x256xf32> to vector<4x256xf32>
    %363 = arith.mulf %355, %362 : vector<4x256xf32>
    %364 = vector.broadcast %361 : vector<1x256xf32> to vector<4x256xf32>
    %365 = arith.mulf %357, %364 : vector<4x256xf32>
    %366 = arith.subf %363, %365 : vector<4x256xf32>
    %367 = arith.addf %348, %366 : vector<4x256xf32>
    %368 = vector.broadcast %361 : vector<1x256xf32> to vector<4x256xf32>
    %369 = arith.mulf %355, %368 : vector<4x256xf32>
    %370 = vector.broadcast %359 : vector<1x256xf32> to vector<4x256xf32>
    %371 = arith.mulf %357, %370 : vector<4x256xf32>
    %372 = arith.addf %369, %371 : vector<4x256xf32>
    %373 = arith.addf %353, %372 : vector<4x256xf32>
    %c2_235 = arith.constant 2 : index
    %c0_236 = arith.constant 0 : index
    %c0_237 = arith.constant 0 : index
    %374 = vector.load %arg2[%c2_235, %c0_236, %c0_237] : memref<4x4x256xf32, #tpu.memory_space<vmem>>, vector<1x4x256xf32>
    %375 = vector.shape_cast %374 : vector<1x4x256xf32> to vector<4x256xf32>
    %c2_238 = arith.constant 2 : index
    %c0_239 = arith.constant 0 : index
    %c0_240 = arith.constant 0 : index
    %376 = vector.load %arg3[%c2_238, %c0_239, %c0_240] : memref<4x4x256xf32, #tpu.memory_space<vmem>>, vector<1x4x256xf32>
    %377 = vector.shape_cast %376 : vector<1x4x256xf32> to vector<4x256xf32>
    %c4_241 = arith.constant 4 : index
    %c2_242 = arith.constant 2 : index
    %c0_243 = arith.constant 0 : index
    %378 = vector.load %arg4[%c4_241, %c2_242, %c0_243] : memref<8x4x256xf32, #tpu.memory_space<vmem>>, vector<1x1x256xf32>
    %379 = vector.shape_cast %378 : vector<1x1x256xf32> to vector<1x256xf32>
    %c4_244 = arith.constant 4 : index
    %c2_245 = arith.constant 2 : index
    %c0_246 = arith.constant 0 : index
    %380 = vector.load %arg5[%c4_244, %c2_245, %c0_246] : memref<8x4x256xf32, #tpu.memory_space<vmem>>, vector<1x1x256xf32>
    %381 = vector.shape_cast %380 : vector<1x1x256xf32> to vector<1x256xf32>
    %382 = vector.broadcast %379 : vector<1x256xf32> to vector<4x256xf32>
    %383 = arith.mulf %375, %382 : vector<4x256xf32>
    %384 = vector.broadcast %381 : vector<1x256xf32> to vector<4x256xf32>
    %385 = arith.mulf %377, %384 : vector<4x256xf32>
    %386 = arith.subf %383, %385 : vector<4x256xf32>
    %387 = arith.addf %367, %386 : vector<4x256xf32>
    %388 = vector.broadcast %381 : vector<1x256xf32> to vector<4x256xf32>
    %389 = arith.mulf %375, %388 : vector<4x256xf32>
    %390 = vector.broadcast %379 : vector<1x256xf32> to vector<4x256xf32>
    %391 = arith.mulf %377, %390 : vector<4x256xf32>
    %392 = arith.addf %389, %391 : vector<4x256xf32>
    %393 = arith.addf %373, %392 : vector<4x256xf32>
    %c3_247 = arith.constant 3 : index
    %c0_248 = arith.constant 0 : index
    %c0_249 = arith.constant 0 : index
    %394 = vector.load %arg2[%c3_247, %c0_248, %c0_249] : memref<4x4x256xf32, #tpu.memory_space<vmem>>, vector<1x4x256xf32>
    %395 = vector.shape_cast %394 : vector<1x4x256xf32> to vector<4x256xf32>
    %c3_250 = arith.constant 3 : index
    %c0_251 = arith.constant 0 : index
    %c0_252 = arith.constant 0 : index
    %396 = vector.load %arg3[%c3_250, %c0_251, %c0_252] : memref<4x4x256xf32, #tpu.memory_space<vmem>>, vector<1x4x256xf32>
    %397 = vector.shape_cast %396 : vector<1x4x256xf32> to vector<4x256xf32>
    %c4_253 = arith.constant 4 : index
    %c3_254 = arith.constant 3 : index
    %c0_255 = arith.constant 0 : index
    %398 = vector.load %arg4[%c4_253, %c3_254, %c0_255] : memref<8x4x256xf32, #tpu.memory_space<vmem>>, vector<1x1x256xf32>
    %399 = vector.shape_cast %398 : vector<1x1x256xf32> to vector<1x256xf32>
    %c4_256 = arith.constant 4 : index
    %c3_257 = arith.constant 3 : index
    %c0_258 = arith.constant 0 : index
    %400 = vector.load %arg5[%c4_256, %c3_257, %c0_258] : memref<8x4x256xf32, #tpu.memory_space<vmem>>, vector<1x1x256xf32>
    %401 = vector.shape_cast %400 : vector<1x1x256xf32> to vector<1x256xf32>
    %402 = vector.broadcast %399 : vector<1x256xf32> to vector<4x256xf32>
    %403 = arith.mulf %395, %402 : vector<4x256xf32>
    %404 = vector.broadcast %401 : vector<1x256xf32> to vector<4x256xf32>
    %405 = arith.mulf %397, %404 : vector<4x256xf32>
    %406 = arith.subf %403, %405 : vector<4x256xf32>
    %407 = arith.addf %387, %406 : vector<4x256xf32>
    %408 = vector.broadcast %401 : vector<1x256xf32> to vector<4x256xf32>
    %409 = arith.mulf %395, %408 : vector<4x256xf32>
    %410 = vector.broadcast %399 : vector<1x256xf32> to vector<4x256xf32>
    %411 = arith.mulf %397, %410 : vector<4x256xf32>
    %412 = arith.addf %409, %411 : vector<4x256xf32>
    %413 = arith.addf %393, %412 : vector<4x256xf32>
    %c4_259 = arith.constant 4 : index
    %c0_260 = arith.constant 0 : index
    %c0_261 = arith.constant 0 : index
    %414 = vector.load %arg6[%c4_259, %c0_260, %c0_261] : memref<8x4x256xf32, #tpu.memory_space<vmem>>, vector<1x4x256xf32>
    %415 = vector.shape_cast %414 : vector<1x4x256xf32> to vector<4x256xf32>
    %416 = vector.shape_cast %407 : vector<4x256xf32> to vector<1x4x256xf32>
    tpu.vector_store %arg6[%c4_259, %c0_260, %c0_261], %416 {strides = array<i32>} : memref<8x4x256xf32, #tpu.memory_space<vmem>>, vector<1x4x256xf32>,
    %c4_262 = arith.constant 4 : index
    %c0_263 = arith.constant 0 : index
    %c0_264 = arith.constant 0 : index
    %417 = vector.load %arg7[%c4_262, %c0_263, %c0_264] : memref<8x4x256xf32, #tpu.memory_space<vmem>>, vector<1x4x256xf32>
    %418 = vector.shape_cast %417 : vector<1x4x256xf32> to vector<4x256xf32>
    %419 = vector.shape_cast %413 : vector<4x256xf32> to vector<1x4x256xf32>
    tpu.vector_store %arg7[%c4_262, %c0_263, %c0_264], %419 {strides = array<i32>} : memref<8x4x256xf32, #tpu.memory_space<vmem>>, vector<1x4x256xf32>,
    %c0_265 = arith.constant 0 : index
    %c0_266 = arith.constant 0 : index
    %c0_267 = arith.constant 0 : index
    %420 = vector.load %arg2[%c0_265, %c0_266, %c0_267] : memref<4x4x256xf32, #tpu.memory_space<vmem>>, vector<1x4x256xf32>
    %421 = vector.shape_cast %420 : vector<1x4x256xf32> to vector<4x256xf32>
    %c0_268 = arith.constant 0 : index
    %c0_269 = arith.constant 0 : index
    %c0_270 = arith.constant 0 : index
    %422 = vector.load %arg3[%c0_268, %c0_269, %c0_270] : memref<4x4x256xf32, #tpu.memory_space<vmem>>, vector<1x4x256xf32>
    %423 = vector.shape_cast %422 : vector<1x4x256xf32> to vector<4x256xf32>
    %c5 = arith.constant 5 : index
    %c0_271 = arith.constant 0 : index
    %c0_272 = arith.constant 0 : index
    %424 = vector.load %arg4[%c5, %c0_271, %c0_272] : memref<8x4x256xf32, #tpu.memory_space<vmem>>, vector<1x1x256xf32>
    %425 = vector.shape_cast %424 : vector<1x1x256xf32> to vector<1x256xf32>
    %c5_273 = arith.constant 5 : index
    %c0_274 = arith.constant 0 : index
    %c0_275 = arith.constant 0 : index
    %426 = vector.load %arg5[%c5_273, %c0_274, %c0_275] : memref<8x4x256xf32, #tpu.memory_space<vmem>>, vector<1x1x256xf32>
    %427 = vector.shape_cast %426 : vector<1x1x256xf32> to vector<1x256xf32>
    %428 = vector.broadcast %425 : vector<1x256xf32> to vector<4x256xf32>
    %429 = arith.mulf %421, %428 : vector<4x256xf32>
    %430 = vector.broadcast %427 : vector<1x256xf32> to vector<4x256xf32>
    %431 = arith.mulf %423, %430 : vector<4x256xf32>
    %432 = arith.subf %429, %431 : vector<4x256xf32>
    %433 = vector.broadcast %427 : vector<1x256xf32> to vector<4x256xf32>
    %434 = arith.mulf %421, %433 : vector<4x256xf32>
    %435 = vector.broadcast %425 : vector<1x256xf32> to vector<4x256xf32>
    %436 = arith.mulf %423, %435 : vector<4x256xf32>
    %437 = arith.addf %434, %436 : vector<4x256xf32>
    %c1_276 = arith.constant 1 : index
    %c0_277 = arith.constant 0 : index
    %c0_278 = arith.constant 0 : index
    %438 = vector.load %arg2[%c1_276, %c0_277, %c0_278] : memref<4x4x256xf32, #tpu.memory_space<vmem>>, vector<1x4x256xf32>
    %439 = vector.shape_cast %438 : vector<1x4x256xf32> to vector<4x256xf32>
    %c1_279 = arith.constant 1 : index
    %c0_280 = arith.constant 0 : index
    %c0_281 = arith.constant 0 : index
    %440 = vector.load %arg3[%c1_279, %c0_280, %c0_281] : memref<4x4x256xf32, #tpu.memory_space<vmem>>, vector<1x4x256xf32>
    %441 = vector.shape_cast %440 : vector<1x4x256xf32> to vector<4x256xf32>
    %c5_282 = arith.constant 5 : index
    %c1_283 = arith.constant 1 : index
    %c0_284 = arith.constant 0 : index
    %442 = vector.load %arg4[%c5_282, %c1_283, %c0_284] : memref<8x4x256xf32, #tpu.memory_space<vmem>>, vector<1x1x256xf32>
    %443 = vector.shape_cast %442 : vector<1x1x256xf32> to vector<1x256xf32>
    %c5_285 = arith.constant 5 : index
    %c1_286 = arith.constant 1 : index
    %c0_287 = arith.constant 0 : index
    %444 = vector.load %arg5[%c5_285, %c1_286, %c0_287] : memref<8x4x256xf32, #tpu.memory_space<vmem>>, vector<1x1x256xf32>
    %445 = vector.shape_cast %444 : vector<1x1x256xf32> to vector<1x256xf32>
    %446 = vector.broadcast %443 : vector<1x256xf32> to vector<4x256xf32>
    %447 = arith.mulf %439, %446 : vector<4x256xf32>
    %448 = vector.broadcast %445 : vector<1x256xf32> to vector<4x256xf32>
    %449 = arith.mulf %441, %448 : vector<4x256xf32>
    %450 = arith.subf %447, %449 : vector<4x256xf32>
    %451 = arith.addf %432, %450 : vector<4x256xf32>
    %452 = vector.broadcast %445 : vector<1x256xf32> to vector<4x256xf32>
    %453 = arith.mulf %439, %452 : vector<4x256xf32>
    %454 = vector.broadcast %443 : vector<1x256xf32> to vector<4x256xf32>
    %455 = arith.mulf %441, %454 : vector<4x256xf32>
    %456 = arith.addf %453, %455 : vector<4x256xf32>
    %457 = arith.addf %437, %456 : vector<4x256xf32>
    %c2_288 = arith.constant 2 : index
    %c0_289 = arith.constant 0 : index
    %c0_290 = arith.constant 0 : index
    %458 = vector.load %arg2[%c2_288, %c0_289, %c0_290] : memref<4x4x256xf32, #tpu.memory_space<vmem>>, vector<1x4x256xf32>
    %459 = vector.shape_cast %458 : vector<1x4x256xf32> to vector<4x256xf32>
    %c2_291 = arith.constant 2 : index
    %c0_292 = arith.constant 0 : index
    %c0_293 = arith.constant 0 : index
    %460 = vector.load %arg3[%c2_291, %c0_292, %c0_293] : memref<4x4x256xf32, #tpu.memory_space<vmem>>, vector<1x4x256xf32>
    %461 = vector.shape_cast %460 : vector<1x4x256xf32> to vector<4x256xf32>
    %c5_294 = arith.constant 5 : index
    %c2_295 = arith.constant 2 : index
    %c0_296 = arith.constant 0 : index
    %462 = vector.load %arg4[%c5_294, %c2_295, %c0_296] : memref<8x4x256xf32, #tpu.memory_space<vmem>>, vector<1x1x256xf32>
    %463 = vector.shape_cast %462 : vector<1x1x256xf32> to vector<1x256xf32>
    %c5_297 = arith.constant 5 : index
    %c2_298 = arith.constant 2 : index
    %c0_299 = arith.constant 0 : index
    %464 = vector.load %arg5[%c5_297, %c2_298, %c0_299] : memref<8x4x256xf32, #tpu.memory_space<vmem>>, vector<1x1x256xf32>
    %465 = vector.shape_cast %464 : vector<1x1x256xf32> to vector<1x256xf32>
    %466 = vector.broadcast %463 : vector<1x256xf32> to vector<4x256xf32>
    %467 = arith.mulf %459, %466 : vector<4x256xf32>
    %468 = vector.broadcast %465 : vector<1x256xf32> to vector<4x256xf32>
    %469 = arith.mulf %461, %468 : vector<4x256xf32>
    %470 = arith.subf %467, %469 : vector<4x256xf32>
    %471 = arith.addf %451, %470 : vector<4x256xf32>
    %472 = vector.broadcast %465 : vector<1x256xf32> to vector<4x256xf32>
    %473 = arith.mulf %459, %472 : vector<4x256xf32>
    %474 = vector.broadcast %463 : vector<1x256xf32> to vector<4x256xf32>
    %475 = arith.mulf %461, %474 : vector<4x256xf32>
    %476 = arith.addf %473, %475 : vector<4x256xf32>
    %477 = arith.addf %457, %476 : vector<4x256xf32>
    %c3_300 = arith.constant 3 : index
    %c0_301 = arith.constant 0 : index
    %c0_302 = arith.constant 0 : index
    %478 = vector.load %arg2[%c3_300, %c0_301, %c0_302] : memref<4x4x256xf32, #tpu.memory_space<vmem>>, vector<1x4x256xf32>
    %479 = vector.shape_cast %478 : vector<1x4x256xf32> to vector<4x256xf32>
    %c3_303 = arith.constant 3 : index
    %c0_304 = arith.constant 0 : index
    %c0_305 = arith.constant 0 : index
    %480 = vector.load %arg3[%c3_303, %c0_304, %c0_305] : memref<4x4x256xf32, #tpu.memory_space<vmem>>, vector<1x4x256xf32>
    %481 = vector.shape_cast %480 : vector<1x4x256xf32> to vector<4x256xf32>
    %c5_306 = arith.constant 5 : index
    %c3_307 = arith.constant 3 : index
    %c0_308 = arith.constant 0 : index
    %482 = vector.load %arg4[%c5_306, %c3_307, %c0_308] : memref<8x4x256xf32, #tpu.memory_space<vmem>>, vector<1x1x256xf32>
    %483 = vector.shape_cast %482 : vector<1x1x256xf32> to vector<1x256xf32>
    %c5_309 = arith.constant 5 : index
    %c3_310 = arith.constant 3 : index
    %c0_311 = arith.constant 0 : index
    %484 = vector.load %arg5[%c5_309, %c3_310, %c0_311] : memref<8x4x256xf32, #tpu.memory_space<vmem>>, vector<1x1x256xf32>
    %485 = vector.shape_cast %484 : vector<1x1x256xf32> to vector<1x256xf32>
    %486 = vector.broadcast %483 : vector<1x256xf32> to vector<4x256xf32>
    %487 = arith.mulf %479, %486 : vector<4x256xf32>
    %488 = vector.broadcast %485 : vector<1x256xf32> to vector<4x256xf32>
    %489 = arith.mulf %481, %488 : vector<4x256xf32>
    %490 = arith.subf %487, %489 : vector<4x256xf32>
    %491 = arith.addf %471, %490 : vector<4x256xf32>
    %492 = vector.broadcast %485 : vector<1x256xf32> to vector<4x256xf32>
    %493 = arith.mulf %479, %492 : vector<4x256xf32>
    %494 = vector.broadcast %483 : vector<1x256xf32> to vector<4x256xf32>
    %495 = arith.mulf %481, %494 : vector<4x256xf32>
    %496 = arith.addf %493, %495 : vector<4x256xf32>
    %497 = arith.addf %477, %496 : vector<4x256xf32>
    %c5_312 = arith.constant 5 : index
    %c0_313 = arith.constant 0 : index
    %c0_314 = arith.constant 0 : index
    %498 = vector.load %arg6[%c5_312, %c0_313, %c0_314] : memref<8x4x256xf32, #tpu.memory_space<vmem>>, vector<1x4x256xf32>
    %499 = vector.shape_cast %498 : vector<1x4x256xf32> to vector<4x256xf32>
    %500 = vector.shape_cast %491 : vector<4x256xf32> to vector<1x4x256xf32>
    tpu.vector_store %arg6[%c5_312, %c0_313, %c0_314], %500 {strides = array<i32>} : memref<8x4x256xf32, #tpu.memory_space<vmem>>, vector<1x4x256xf32>,
    %c5_315 = arith.constant 5 : index
    %c0_316 = arith.constant 0 : index
    %c0_317 = arith.constant 0 : index
    %501 = vector.load %arg7[%c5_315, %c0_316, %c0_317] : memref<8x4x256xf32, #tpu.memory_space<vmem>>, vector<1x4x256xf32>
    %502 = vector.shape_cast %501 : vector<1x4x256xf32> to vector<4x256xf32>
    %503 = vector.shape_cast %497 : vector<4x256xf32> to vector<1x4x256xf32>
    tpu.vector_store %arg7[%c5_315, %c0_316, %c0_317], %503 {strides = array<i32>} : memref<8x4x256xf32, #tpu.memory_space<vmem>>, vector<1x4x256xf32>,
    %c0_318 = arith.constant 0 : index
    %c0_319 = arith.constant 0 : index
    %c0_320 = arith.constant 0 : index
    %504 = vector.load %arg2[%c0_318, %c0_319, %c0_320] : memref<4x4x256xf32, #tpu.memory_space<vmem>>, vector<1x4x256xf32>
    %505 = vector.shape_cast %504 : vector<1x4x256xf32> to vector<4x256xf32>
    %c0_321 = arith.constant 0 : index
    %c0_322 = arith.constant 0 : index
    %c0_323 = arith.constant 0 : index
    %506 = vector.load %arg3[%c0_321, %c0_322, %c0_323] : memref<4x4x256xf32, #tpu.memory_space<vmem>>, vector<1x4x256xf32>
    %507 = vector.shape_cast %506 : vector<1x4x256xf32> to vector<4x256xf32>
    %c6 = arith.constant 6 : index
    %c0_324 = arith.constant 0 : index
    %c0_325 = arith.constant 0 : index
    %508 = vector.load %arg4[%c6, %c0_324, %c0_325] : memref<8x4x256xf32, #tpu.memory_space<vmem>>, vector<1x1x256xf32>
    %509 = vector.shape_cast %508 : vector<1x1x256xf32> to vector<1x256xf32>
    %c6_326 = arith.constant 6 : index
    %c0_327 = arith.constant 0 : index
    %c0_328 = arith.constant 0 : index
    %510 = vector.load %arg5[%c6_326, %c0_327, %c0_328] : memref<8x4x256xf32, #tpu.memory_space<vmem>>, vector<1x1x256xf32>
    %511 = vector.shape_cast %510 : vector<1x1x256xf32> to vector<1x256xf32>
    %512 = vector.broadcast %509 : vector<1x256xf32> to vector<4x256xf32>
    %513 = arith.mulf %505, %512 : vector<4x256xf32>
    %514 = vector.broadcast %511 : vector<1x256xf32> to vector<4x256xf32>
    %515 = arith.mulf %507, %514 : vector<4x256xf32>
    %516 = arith.subf %513, %515 : vector<4x256xf32>
    %517 = vector.broadcast %511 : vector<1x256xf32> to vector<4x256xf32>
    %518 = arith.mulf %505, %517 : vector<4x256xf32>
    %519 = vector.broadcast %509 : vector<1x256xf32> to vector<4x256xf32>
    %520 = arith.mulf %507, %519 : vector<4x256xf32>
    %521 = arith.addf %518, %520 : vector<4x256xf32>
    %c1_329 = arith.constant 1 : index
    %c0_330 = arith.constant 0 : index
    %c0_331 = arith.constant 0 : index
    %522 = vector.load %arg2[%c1_329, %c0_330, %c0_331] : memref<4x4x256xf32, #tpu.memory_space<vmem>>, vector<1x4x256xf32>
    %523 = vector.shape_cast %522 : vector<1x4x256xf32> to vector<4x256xf32>
    %c1_332 = arith.constant 1 : index
    %c0_333 = arith.constant 0 : index
    %c0_334 = arith.constant 0 : index
    %524 = vector.load %arg3[%c1_332, %c0_333, %c0_334] : memref<4x4x256xf32, #tpu.memory_space<vmem>>, vector<1x4x256xf32>
    %525 = vector.shape_cast %524 : vector<1x4x256xf32> to vector<4x256xf32>
    %c6_335 = arith.constant 6 : index
    %c1_336 = arith.constant 1 : index
    %c0_337 = arith.constant 0 : index
    %526 = vector.load %arg4[%c6_335, %c1_336, %c0_337] : memref<8x4x256xf32, #tpu.memory_space<vmem>>, vector<1x1x256xf32>
    %527 = vector.shape_cast %526 : vector<1x1x256xf32> to vector<1x256xf32>
    %c6_338 = arith.constant 6 : index
    %c1_339 = arith.constant 1 : index
    %c0_340 = arith.constant 0 : index
    %528 = vector.load %arg5[%c6_338, %c1_339, %c0_340] : memref<8x4x256xf32, #tpu.memory_space<vmem>>, vector<1x1x256xf32>
    %529 = vector.shape_cast %528 : vector<1x1x256xf32> to vector<1x256xf32>
    %530 = vector.broadcast %527 : vector<1x256xf32> to vector<4x256xf32>
    %531 = arith.mulf %523, %530 : vector<4x256xf32>
    %532 = vector.broadcast %529 : vector<1x256xf32> to vector<4x256xf32>
    %533 = arith.mulf %525, %532 : vector<4x256xf32>
    %534 = arith.subf %531, %533 : vector<4x256xf32>
    %535 = arith.addf %516, %534 : vector<4x256xf32>
    %536 = vector.broadcast %529 : vector<1x256xf32> to vector<4x256xf32>
    %537 = arith.mulf %523, %536 : vector<4x256xf32>
    %538 = vector.broadcast %527 : vector<1x256xf32> to vector<4x256xf32>
    %539 = arith.mulf %525, %538 : vector<4x256xf32>
    %540 = arith.addf %537, %539 : vector<4x256xf32>
    %541 = arith.addf %521, %540 : vector<4x256xf32>
    %c2_341 = arith.constant 2 : index
    %c0_342 = arith.constant 0 : index
    %c0_343 = arith.constant 0 : index
    %542 = vector.load %arg2[%c2_341, %c0_342, %c0_343] : memref<4x4x256xf32, #tpu.memory_space<vmem>>, vector<1x4x256xf32>
    %543 = vector.shape_cast %542 : vector<1x4x256xf32> to vector<4x256xf32>
    %c2_344 = arith.constant 2 : index
    %c0_345 = arith.constant 0 : index
    %c0_346 = arith.constant 0 : index
    %544 = vector.load %arg3[%c2_344, %c0_345, %c0_346] : memref<4x4x256xf32, #tpu.memory_space<vmem>>, vector<1x4x256xf32>
    %545 = vector.shape_cast %544 : vector<1x4x256xf32> to vector<4x256xf32>
    %c6_347 = arith.constant 6 : index
    %c2_348 = arith.constant 2 : index
    %c0_349 = arith.constant 0 : index
    %546 = vector.load %arg4[%c6_347, %c2_348, %c0_349] : memref<8x4x256xf32, #tpu.memory_space<vmem>>, vector<1x1x256xf32>
    %547 = vector.shape_cast %546 : vector<1x1x256xf32> to vector<1x256xf32>
    %c6_350 = arith.constant 6 : index
    %c2_351 = arith.constant 2 : index
    %c0_352 = arith.constant 0 : index
    %548 = vector.load %arg5[%c6_350, %c2_351, %c0_352] : memref<8x4x256xf32, #tpu.memory_space<vmem>>, vector<1x1x256xf32>
    %549 = vector.shape_cast %548 : vector<1x1x256xf32> to vector<1x256xf32>
    %550 = vector.broadcast %547 : vector<1x256xf32> to vector<4x256xf32>
    %551 = arith.mulf %543, %550 : vector<4x256xf32>
    %552 = vector.broadcast %549 : vector<1x256xf32> to vector<4x256xf32>
    %553 = arith.mulf %545, %552 : vector<4x256xf32>
    %554 = arith.subf %551, %553 : vector<4x256xf32>
    %555 = arith.addf %535, %554 : vector<4x256xf32>
    %556 = vector.broadcast %549 : vector<1x256xf32> to vector<4x256xf32>
    %557 = arith.mulf %543, %556 : vector<4x256xf32>
    %558 = vector.broadcast %547 : vector<1x256xf32> to vector<4x256xf32>
    %559 = arith.mulf %545, %558 : vector<4x256xf32>
    %560 = arith.addf %557, %559 : vector<4x256xf32>
    %561 = arith.addf %541, %560 : vector<4x256xf32>
    %c3_353 = arith.constant 3 : index
    %c0_354 = arith.constant 0 : index
    %c0_355 = arith.constant 0 : index
    %562 = vector.load %arg2[%c3_353, %c0_354, %c0_355] : memref<4x4x256xf32, #tpu.memory_space<vmem>>, vector<1x4x256xf32>
    %563 = vector.shape_cast %562 : vector<1x4x256xf32> to vector<4x256xf32>
    %c3_356 = arith.constant 3 : index
    %c0_357 = arith.constant 0 : index
    %c0_358 = arith.constant 0 : index
    %564 = vector.load %arg3[%c3_356, %c0_357, %c0_358] : memref<4x4x256xf32, #tpu.memory_space<vmem>>, vector<1x4x256xf32>
    %565 = vector.shape_cast %564 : vector<1x4x256xf32> to vector<4x256xf32>
    %c6_359 = arith.constant 6 : index
    %c3_360 = arith.constant 3 : index
    %c0_361 = arith.constant 0 : index
    %566 = vector.load %arg4[%c6_359, %c3_360, %c0_361] : memref<8x4x256xf32, #tpu.memory_space<vmem>>, vector<1x1x256xf32>
    %567 = vector.shape_cast %566 : vector<1x1x256xf32> to vector<1x256xf32>
    %c6_362 = arith.constant 6 : index
    %c3_363 = arith.constant 3 : index
    %c0_364 = arith.constant 0 : index
    %568 = vector.load %arg5[%c6_362, %c3_363, %c0_364] : memref<8x4x256xf32, #tpu.memory_space<vmem>>, vector<1x1x256xf32>
    %569 = vector.shape_cast %568 : vector<1x1x256xf32> to vector<1x256xf32>
    %570 = vector.broadcast %567 : vector<1x256xf32> to vector<4x256xf32>
    %571 = arith.mulf %563, %570 : vector<4x256xf32>
    %572 = vector.broadcast %569 : vector<1x256xf32> to vector<4x256xf32>
    %573 = arith.mulf %565, %572 : vector<4x256xf32>
    %574 = arith.subf %571, %573 : vector<4x256xf32>
    %575 = arith.addf %555, %574 : vector<4x256xf32>
    %576 = vector.broadcast %569 : vector<1x256xf32> to vector<4x256xf32>
    %577 = arith.mulf %563, %576 : vector<4x256xf32>
    %578 = vector.broadcast %567 : vector<1x256xf32> to vector<4x256xf32>
    %579 = arith.mulf %565, %578 : vector<4x256xf32>
    %580 = arith.addf %577, %579 : vector<4x256xf32>
    %581 = arith.addf %561, %580 : vector<4x256xf32>
    %c6_365 = arith.constant 6 : index
    %c0_366 = arith.constant 0 : index
    %c0_367 = arith.constant 0 : index
    %582 = vector.load %arg6[%c6_365, %c0_366, %c0_367] : memref<8x4x256xf32, #tpu.memory_space<vmem>>, vector<1x4x256xf32>
    %583 = vector.shape_cast %582 : vector<1x4x256xf32> to vector<4x256xf32>
    %584 = vector.shape_cast %575 : vector<4x256xf32> to vector<1x4x256xf32>
    tpu.vector_store %arg6[%c6_365, %c0_366, %c0_367], %584 {strides = array<i32>} : memref<8x4x256xf32, #tpu.memory_space<vmem>>, vector<1x4x256xf32>,
    %c6_368 = arith.constant 6 : index
    %c0_369 = arith.constant 0 : index
    %c0_370 = arith.constant 0 : index
    %585 = vector.load %arg7[%c6_368, %c0_369, %c0_370] : memref<8x4x256xf32, #tpu.memory_space<vmem>>, vector<1x4x256xf32>
    %586 = vector.shape_cast %585 : vector<1x4x256xf32> to vector<4x256xf32>
    %587 = vector.shape_cast %581 : vector<4x256xf32> to vector<1x4x256xf32>
    tpu.vector_store %arg7[%c6_368, %c0_369, %c0_370], %587 {strides = array<i32>} : memref<8x4x256xf32, #tpu.memory_space<vmem>>, vector<1x4x256xf32>,
    %c0_371 = arith.constant 0 : index
    %c0_372 = arith.constant 0 : index
    %c0_373 = arith.constant 0 : index
    %588 = vector.load %arg2[%c0_371, %c0_372, %c0_373] : memref<4x4x256xf32, #tpu.memory_space<vmem>>, vector<1x4x256xf32>
    %589 = vector.shape_cast %588 : vector<1x4x256xf32> to vector<4x256xf32>
    %c0_374 = arith.constant 0 : index
    %c0_375 = arith.constant 0 : index
    %c0_376 = arith.constant 0 : index
    %590 = vector.load %arg3[%c0_374, %c0_375, %c0_376] : memref<4x4x256xf32, #tpu.memory_space<vmem>>, vector<1x4x256xf32>
    %591 = vector.shape_cast %590 : vector<1x4x256xf32> to vector<4x256xf32>
    %c7 = arith.constant 7 : index
    %c0_377 = arith.constant 0 : index
    %c0_378 = arith.constant 0 : index
    %592 = vector.load %arg4[%c7, %c0_377, %c0_378] : memref<8x4x256xf32, #tpu.memory_space<vmem>>, vector<1x1x256xf32>
    %593 = vector.shape_cast %592 : vector<1x1x256xf32> to vector<1x256xf32>
    %c7_379 = arith.constant 7 : index
    %c0_380 = arith.constant 0 : index
    %c0_381 = arith.constant 0 : index
    %594 = vector.load %arg5[%c7_379, %c0_380, %c0_381] : memref<8x4x256xf32, #tpu.memory_space<vmem>>, vector<1x1x256xf32>
    %595 = vector.shape_cast %594 : vector<1x1x256xf32> to vector<1x256xf32>
    %596 = vector.broadcast %593 : vector<1x256xf32> to vector<4x256xf32>
    %597 = arith.mulf %589, %596 : vector<4x256xf32>
    %598 = vector.broadcast %595 : vector<1x256xf32> to vector<4x256xf32>
    %599 = arith.mulf %591, %598 : vector<4x256xf32>
    %600 = arith.subf %597, %599 : vector<4x256xf32>
    %601 = vector.broadcast %595 : vector<1x256xf32> to vector<4x256xf32>
    %602 = arith.mulf %589, %601 : vector<4x256xf32>
    %603 = vector.broadcast %593 : vector<1x256xf32> to vector<4x256xf32>
    %604 = arith.mulf %591, %603 : vector<4x256xf32>
    %605 = arith.addf %602, %604 : vector<4x256xf32>
    %c1_382 = arith.constant 1 : index
    %c0_383 = arith.constant 0 : index
    %c0_384 = arith.constant 0 : index
    %606 = vector.load %arg2[%c1_382, %c0_383, %c0_384] : memref<4x4x256xf32, #tpu.memory_space<vmem>>, vector<1x4x256xf32>
    %607 = vector.shape_cast %606 : vector<1x4x256xf32> to vector<4x256xf32>
    %c1_385 = arith.constant 1 : index
    %c0_386 = arith.constant 0 : index
    %c0_387 = arith.constant 0 : index
    %608 = vector.load %arg3[%c1_385, %c0_386, %c0_387] : memref<4x4x256xf32, #tpu.memory_space<vmem>>, vector<1x4x256xf32>
    %609 = vector.shape_cast %608 : vector<1x4x256xf32> to vector<4x256xf32>
    %c7_388 = arith.constant 7 : index
    %c1_389 = arith.constant 1 : index
    %c0_390 = arith.constant 0 : index
    %610 = vector.load %arg4[%c7_388, %c1_389, %c0_390] : memref<8x4x256xf32, #tpu.memory_space<vmem>>, vector<1x1x256xf32>
    %611 = vector.shape_cast %610 : vector<1x1x256xf32> to vector<1x256xf32>
    %c7_391 = arith.constant 7 : index
    %c1_392 = arith.constant 1 : index
    %c0_393 = arith.constant 0 : index
    %612 = vector.load %arg5[%c7_391, %c1_392, %c0_393] : memref<8x4x256xf32, #tpu.memory_space<vmem>>, vector<1x1x256xf32>
    %613 = vector.shape_cast %612 : vector<1x1x256xf32> to vector<1x256xf32>
    %614 = vector.broadcast %611 : vector<1x256xf32> to vector<4x256xf32>
    %615 = arith.mulf %607, %614 : vector<4x256xf32>
    %616 = vector.broadcast %613 : vector<1x256xf32> to vector<4x256xf32>
    %617 = arith.mulf %609, %616 : vector<4x256xf32>
    %618 = arith.subf %615, %617 : vector<4x256xf32>
    %619 = arith.addf %600, %618 : vector<4x256xf32>
    %620 = vector.broadcast %613 : vector<1x256xf32> to vector<4x256xf32>
    %621 = arith.mulf %607, %620 : vector<4x256xf32>
    %622 = vector.broadcast %611 : vector<1x256xf32> to vector<4x256xf32>
    %623 = arith.mulf %609, %622 : vector<4x256xf32>
    %624 = arith.addf %621, %623 : vector<4x256xf32>
    %625 = arith.addf %605, %624 : vector<4x256xf32>
    %c2_394 = arith.constant 2 : index
    %c0_395 = arith.constant 0 : index
    %c0_396 = arith.constant 0 : index
    %626 = vector.load %arg2[%c2_394, %c0_395, %c0_396] : memref<4x4x256xf32, #tpu.memory_space<vmem>>, vector<1x4x256xf32>
    %627 = vector.shape_cast %626 : vector<1x4x256xf32> to vector<4x256xf32>
    %c2_397 = arith.constant 2 : index
    %c0_398 = arith.constant 0 : index
    %c0_399 = arith.constant 0 : index
    %628 = vector.load %arg3[%c2_397, %c0_398, %c0_399] : memref<4x4x256xf32, #tpu.memory_space<vmem>>, vector<1x4x256xf32>
    %629 = vector.shape_cast %628 : vector<1x4x256xf32> to vector<4x256xf32>
    %c7_400 = arith.constant 7 : index
    %c2_401 = arith.constant 2 : index
    %c0_402 = arith.constant 0 : index
    %630 = vector.load %arg4[%c7_400, %c2_401, %c0_402] : memref<8x4x256xf32, #tpu.memory_space<vmem>>, vector<1x1x256xf32>
    %631 = vector.shape_cast %630 : vector<1x1x256xf32> to vector<1x256xf32>
    %c7_403 = arith.constant 7 : index
    %c2_404 = arith.constant 2 : index
    %c0_405 = arith.constant 0 : index
    %632 = vector.load %arg5[%c7_403, %c2_404, %c0_405] : memref<8x4x256xf32, #tpu.memory_space<vmem>>, vector<1x1x256xf32>
    %633 = vector.shape_cast %632 : vector<1x1x256xf32> to vector<1x256xf32>
    %634 = vector.broadcast %631 : vector<1x256xf32> to vector<4x256xf32>
    %635 = arith.mulf %627, %634 : vector<4x256xf32>
    %636 = vector.broadcast %633 : vector<1x256xf32> to vector<4x256xf32>
    %637 = arith.mulf %629, %636 : vector<4x256xf32>
    %638 = arith.subf %635, %637 : vector<4x256xf32>
    %639 = arith.addf %619, %638 : vector<4x256xf32>
    %640 = vector.broadcast %633 : vector<1x256xf32> to vector<4x256xf32>
    %641 = arith.mulf %627, %640 : vector<4x256xf32>
    %642 = vector.broadcast %631 : vector<1x256xf32> to vector<4x256xf32>
    %643 = arith.mulf %629, %642 : vector<4x256xf32>
    %644 = arith.addf %641, %643 : vector<4x256xf32>
    %645 = arith.addf %625, %644 : vector<4x256xf32>
    %c3_406 = arith.constant 3 : index
    %c0_407 = arith.constant 0 : index
    %c0_408 = arith.constant 0 : index
    %646 = vector.load %arg2[%c3_406, %c0_407, %c0_408] : memref<4x4x256xf32, #tpu.memory_space<vmem>>, vector<1x4x256xf32>
    %647 = vector.shape_cast %646 : vector<1x4x256xf32> to vector<4x256xf32>
    %c3_409 = arith.constant 3 : index
    %c0_410 = arith.constant 0 : index
    %c0_411 = arith.constant 0 : index
    %648 = vector.load %arg3[%c3_409, %c0_410, %c0_411] : memref<4x4x256xf32, #tpu.memory_space<vmem>>, vector<1x4x256xf32>
    %649 = vector.shape_cast %648 : vector<1x4x256xf32> to vector<4x256xf32>
    %c7_412 = arith.constant 7 : index
    %c3_413 = arith.constant 3 : index
    %c0_414 = arith.constant 0 : index
    %650 = vector.load %arg4[%c7_412, %c3_413, %c0_414] : memref<8x4x256xf32, #tpu.memory_space<vmem>>, vector<1x1x256xf32>
    %651 = vector.shape_cast %650 : vector<1x1x256xf32> to vector<1x256xf32>
    %c7_415 = arith.constant 7 : index
    %c3_416 = arith.constant 3 : index
    %c0_417 = arith.constant 0 : index
    %652 = vector.load %arg5[%c7_415, %c3_416, %c0_417] : memref<8x4x256xf32, #tpu.memory_space<vmem>>, vector<1x1x256xf32>
    %653 = vector.shape_cast %652 : vector<1x1x256xf32> to vector<1x256xf32>
    %654 = vector.broadcast %651 : vector<1x256xf32> to vector<4x256xf32>
    %655 = arith.mulf %647, %654 : vector<4x256xf32>
    %656 = vector.broadcast %653 : vector<1x256xf32> to vector<4x256xf32>
    %657 = arith.mulf %649, %656 : vector<4x256xf32>
    %658 = arith.subf %655, %657 : vector<4x256xf32>
    %659 = arith.addf %639, %658 : vector<4x256xf32>
    %660 = vector.broadcast %653 : vector<1x256xf32> to vector<4x256xf32>
    %661 = arith.mulf %647, %660 : vector<4x256xf32>
    %662 = vector.broadcast %651 : vector<1x256xf32> to vector<4x256xf32>
    %663 = arith.mulf %649, %662 : vector<4x256xf32>
    %664 = arith.addf %661, %663 : vector<4x256xf32>
    %665 = arith.addf %645, %664 : vector<4x256xf32>
    %c7_418 = arith.constant 7 : index
    %c0_419 = arith.constant 0 : index
    %c0_420 = arith.constant 0 : index
    %666 = vector.load %arg6[%c7_418, %c0_419, %c0_420] : memref<8x4x256xf32, #tpu.memory_space<vmem>>, vector<1x4x256xf32>
    %667 = vector.shape_cast %666 : vector<1x4x256xf32> to vector<4x256xf32>
    %668 = vector.shape_cast %659 : vector<4x256xf32> to vector<1x4x256xf32>
    tpu.vector_store %arg6[%c7_418, %c0_419, %c0_420], %668 {strides = array<i32>} : memref<8x4x256xf32, #tpu.memory_space<vmem>>, vector<1x4x256xf32>,
    %c7_421 = arith.constant 7 : index
    %c0_422 = arith.constant 0 : index
    %c0_423 = arith.constant 0 : index
    %669 = vector.load %arg7[%c7_421, %c0_422, %c0_423] : memref<8x4x256xf32, #tpu.memory_space<vmem>>, vector<1x4x256xf32>
    %670 = vector.shape_cast %669 : vector<1x4x256xf32> to vector<4x256xf32>
    %671 = vector.shape_cast %665 : vector<4x256xf32> to vector<1x4x256xf32>
    tpu.vector_store %arg7[%c7_421, %c0_422, %c0_423], %671 {strides = array<i32>} : memref<8x4x256xf32, #tpu.memory_space<vmem>>, vector<1x4x256xf32>,
    return
  }
  func.func @transform_0(%arg0: i32, %arg1: i32) -> (i32, i32, i32) {
    %c0_i32 = arith.constant 0 : i32
    %c0_i32_0 = arith.constant 0 : i32
    return %c0_i32, %arg1, %arg0 : i32, i32, i32
  }
  func.func @transform_1(%arg0: i32, %arg1: i32) -> (i32, i32, i32) {
    %c0_i32 = arith.constant 0 : i32
    %c0_i32_0 = arith.constant 0 : i32
    return %c0_i32, %arg1, %arg0 : i32, i32, i32
  }
  func.func @transform_2(%arg0: i32, %arg1: i32) -> (i32, i32, i32) {
    %c0_i32 = arith.constant 0 : i32
    %c0_i32_0 = arith.constant 0 : i32
    %c0_i32_1 = arith.constant 0 : i32
    return %c0_i32, %c0_i32_0, %arg0 : i32, i32, i32
  }
  func.func @transform_3(%arg0: i32, %arg1: i32) -> (i32, i32, i32) {
    %c0_i32 = arith.constant 0 : i32
    %c0_i32_0 = arith.constant 0 : i32
    %c0_i32_1 = arith.constant 0 : i32
    return %c0_i32, %c0_i32_0, %arg0 : i32, i32, i32
  }
  func.func @transform_4(%arg0: i32, %arg1: i32) -> (i32, i32, i32) {
    %c0_i32 = arith.constant 0 : i32
    %c0_i32_0 = arith.constant 0 : i32
    return %c0_i32, %arg1, %arg0 : i32, i32, i32
  }
  func.func @transform_5(%arg0: i32, %arg1: i32) -> (i32, i32, i32) {
    %c0_i32 = arith.constant 0 : i32
    %c0_i32_0 = arith.constant 0 : i32
    return %c0_i32, %arg1, %arg0 : i32, i32, i32
  }
}

</mosaic_0001>

<llo_original>
// kernel: _lambda_.1
$region0: #{_lambda_.1}
  #allocation0 [shape = 'u32[]', space=smem, size = 0x4, offset = 0x4, fixed_abs, tag = 'smem constant byte address 0x4 - core index']
  #allocation1 [shape = 'u32[72,128]{1,0:T(1,128)}', space=vmem, size = 0x9000, scoped, tag = 'internal scratch']
  %s0 = inlined_call_operand.vmem [shape: f32[4,4,256], index: 0, kind: input, shape index: {}]
  %s1 = inlined_call_operand.vmem [shape: f32[4,4,256], index: 1, kind: input, shape index: {}]
  %s2 = inlined_call_operand.vmem [shape: f32[8,4,256], index: 2, kind: input, shape index: {}]
  %s3 = inlined_call_operand.vmem [shape: f32[8,4,256], index: 3, kind: input, shape index: {}]
  %s4 = inlined_call_operand.vmem [shape: f32[8,4,256], index: 4, kind: output, shape index: {0}]
  %s5 = inlined_call_operand.vmem [shape: f32[8,4,256], index: 5, kind: output, shape index: {1}]
  %6 = xla_tuple %s4, %s5
  %s7 = sld [smem:[#allocation0]]
  $region34: #{_lambda_.1} parent=0
    _
  %s9 = ssub.s32 1, %s7
  %s10 = scalar_select 0, %s9, %s7
  // Predicated region
  $region2: #{_lambda_.1} parent=0 // pred_check
    _
  $region3: #{_lambda_.1} parent=0 // pred_check_branch
    %12 = sbr.rel (0) target = $region5
  $region4: #{_lambda_.1} parent=0 // pred_region
    _
  $region5: #{_lambda_.1} parent=0 // pred_fallthru
    _
  // Predicated region
  $region6: #{_lambda_.1} parent=0 // pred_check
    _
  $region7: #{_lambda_.1} parent=0 // pred_check_branch
    %14 = sbr.rel (0) target = $region9
  $region8: #{_lambda_.1} parent=0 // pred_region
    _
  $region9: #{_lambda_.1} parent=0 // pred_fallthru
    _
  // Predicated region
  $region10: #{_lambda_.1} parent=0 // pred_check
    _
  $region11: #{_lambda_.1} parent=0 // pred_check_branch
    %16 = sbr.rel (0) target = $region13
  $region12: #{_lambda_.1} parent=0 // pred_region
    _
  $region13: #{_lambda_.1} parent=0 // pred_fallthru
    _
  // Predicated region
  $region14: #{_lambda_.1} parent=0 // pred_check
    _
  $region15: #{_lambda_.1} parent=0 // pred_check_branch
    %18 = sbr.rel (0) target = $region17
  $region16: #{_lambda_.1} parent=0 // pred_region
    _
  $region17: #{_lambda_.1} parent=0 // pred_fallthru
    _
  %v19 = vld [vmem:[%s0] sm:$0xff]
  %v20 = vld [vmem:[%s1] sm:$0xff]
  %v21 = vld [vmem:[%s2] ss:$4 sm:$0x3]
  %v22 = vld [vmem:[%s3] ss:$4 sm:$0x3]
  %v24 = vperm.slane %v21, 0
  %v25 = vperm.slane %v21, 1
  %v26 = vrot.slane %v25, 4
  %vm27 = vcmask 1043456
  %v28 = vsel %vm27, %v24, %v26
  %v30 = vmul.f32 %v19, %v28
  %v32 = vperm.slane %v22, 0
  %v33 = vperm.slane %v22, 1
  %v34 = vrot.slane %v33, 4
  %v35 = vsel %vm27, %v32, %v34
  %v37 = vmul.f32 %v20, %v35
  %v38 = vsub.f32 %v30, %v37
  %v39 = vmul.f32 %v19, %v35
  %v40 = vmul.f32 %v20, %v28
  %v41 = vadd.f32 %v39, %v40
  %s42 = scalar_lea.vmem %s0, 8
  %v43 = vld [vmem:[%s42] sm:$0xff]
  %s44 = scalar_lea.vmem %s1, 8
  %v45 = vld [vmem:[%s44] sm:$0xff]
  %s46 = scalar_lea.vmem %s2, 1
  %v47 = vld [vmem:[%s46] ss:$4 sm:$0x3]
  %s48 = scalar_lea.vmem %s3, 1
  %v49 = vld [vmem:[%s48] ss:$4 sm:$0x3]
  %v51 = vperm.slane %v47, 0
  %v52 = vperm.slane %v47, 1
  %v53 = vrot.slane %v52, 4
  %v54 = vsel %vm27, %v51, %v53
  %v56 = vmul.f32 %v43, %v54
  %v58 = vperm.slane %v49, 0
  %v59 = vperm.slane %v49, 1
  %v60 = vrot.slane %v59, 4
  %v61 = vsel %vm27, %v58, %v60
  %v63 = vmul.f32 %v45, %v61
  %v64 = vsub.f32 %v56, %v63
  %v65 = vadd.f32 %v38, %v64
  %v66 = vmul.f32 %v43, %v61
  %v67 = vmul.f32 %v45, %v54
  %v68 = vadd.f32 %v66, %v67
  %v69 = vadd.f32 %v41, %v68
  %s70 = scalar_lea.vmem %s0, 16
  %v71 = vld [vmem:[%s70] sm:$0xff]
  %s72 = scalar_lea.vmem %s1, 16
  %v73 = vld [vmem:[%s72] sm:$0xff]
  %s74 = scalar_lea.vmem %s2, 2
  %v75 = vld [vmem:[%s74] ss:$4 sm:$0x3]
  %s76 = scalar_lea.vmem %s3, 2
  %v77 = vld [vmem:[%s76] ss:$4 sm:$0x3]
  %v79 = vperm.slane %v75, 0
  %v80 = vperm.slane %v75, 1
  %v81 = vrot.slane %v80, 4
  %v82 = vsel %vm27, %v79, %v81
  %v84 = vmul.f32 %v71, %v82
  %v86 = vperm.slane %v77, 0
  %v87 = vperm.slane %v77, 1
  %v88 = vrot.slane %v87, 4
  %v89 = vsel %vm27, %v86, %v88
  %v91 = vmul.f32 %v73, %v89
  %v92 = vsub.f32 %v84, %v91
  %v93 = vadd.f32 %v65, %v92
  %v94 = vmul.f32 %v71, %v89
  %v95 = vmul.f32 %v73, %v82
  %v96 = vadd.f32 %v94, %v95
  %v97 = vadd.f32 %v69, %v96
  %s98 = scalar_lea.vmem %s0, 24
  %v99 = vld [vmem:[%s98] sm:$0xff]
  %s100 = scalar_lea.vmem %s1, 24
  %v101 = vld [vmem:[%s100] sm:$0xff]
  %s102 = scalar_lea.vmem %s2, 3
  %v103 = vld [vmem:[%s102] ss:$4 sm:$0x3]
  %s104 = scalar_lea.vmem %s3, 3
  %v105 = vld [vmem:[%s104] ss:$4 sm:$0x3]
  %v107 = vperm.slane %v103, 0
  %v108 = vperm.slane %v103, 1
  %v109 = vrot.slane %v108, 4
  %v110 = vsel %vm27, %v107, %v109
  %v112 = vmul.f32 %v99, %v110
  %v114 = vperm.slane %v105, 0
  %v115 = vperm.slane %v105, 1
  %v116 = vrot.slane %v115, 4
  %v117 = vsel %vm27, %v114, %v116
  %v119 = vmul.f32 %v101, %v117
  %v120 = vsub.f32 %v112, %v119
  %v121 = vadd.f32 %v93, %v120
  %v122 = vmul.f32 %v99, %v117
  %v123 = vmul.f32 %v101, %v110
  %v124 = vadd.f32 %v122, %v123
  %v125 = vadd.f32 %v97, %v124
  %126 = vst [vmem:[%s4] sm:$0xff] %v121
  %127 = vst [vmem:[%s5] sm:$0xff] %v125
  %v128 = vld [vmem:[%s0] sm:$0xff]
  %v129 = vld [vmem:[%s1] sm:$0xff]
  %s130 = scalar_lea.vmem %s2, 8
  %v131 = vld [vmem:[%s130] ss:$4 sm:$0x3]
  %s132 = scalar_lea.vmem %s3, 8
  %v133 = vld [vmem:[%s132] ss:$4 sm:$0x3]
  %v135 = vperm.slane %v131, 0
  %v136 = vperm.slane %v131, 1
  %v137 = vrot.slane %v136, 4
  %v138 = vsel %vm27, %v135, %v137
  %v140 = vmul.f32 %v128, %v138
  %v142 = vperm.slane %v133, 0
  %v143 = vperm.slane %v133, 1
  %v144 = vrot.slane %v143, 4
  %v145 = vsel %vm27, %v142, %v144
  %v147 = vmul.f32 %v129, %v145
  %v148 = vsub.f32 %v140, %v147
  %v149 = vmul.f32 %v128, %v145
  %v150 = vmul.f32 %v129, %v138
  %v151 = vadd.f32 %v149, %v150
  %v152 = vld [vmem:[%s42] sm:$0xff]
  %v153 = vld [vmem:[%s44] sm:$0xff]
  %s154 = scalar_lea.vmem %s130, 1
  %v155 = vld [vmem:[%s154] ss:$4 sm:$0x3]
  %s156 = scalar_lea.vmem %s132, 1
  %v157 = vld [vmem:[%s156] ss:$4 sm:$0x3]
  %v159 = vperm.slane %v155, 0
  %v160 = vperm.slane %v155, 1
  %v161 = vrot.slane %v160, 4
  %v162 = vsel %vm27, %v159, %v161
  %v164 = vmul.f32 %v152, %v162
  %v166 = vperm.slane %v157, 0
  %v167 = vperm.slane %v157, 1
  %v168 = vrot.slane %v167, 4
  %v169 = vsel %vm27, %v166, %v168
  %v171 = vmul.f32 %v153, %v169
  %v172 = vsub.f32 %v164, %v171
  %v173 = vadd.f32 %v148, %v172
  %v174 = vmul.f32 %v152, %v169
  %v175 = vmul.f32 %v153, %v162
  %v176 = vadd.f32 %v174, %v175
  %v177 = vadd.f32 %v151, %v176
  %v178 = vld [vmem:[%s70] sm:$0xff]
  %v179 = vld [vmem:[%s72] sm:$0xff]
  %s180 = scalar_lea.vmem %s130, 2
  %v181 = vld [vmem:[%s180] ss:$4 sm:$0x3]
  %s182 = scalar_lea.vmem %s132, 2
  %v183 = vld [vmem:[%s182] ss:$4 sm:$0x3]
  %v185 = vperm.slane %v181, 0
  %v186 = vperm.slane %v181, 1
  %v187 = vrot.slane %v186, 4
  %v188 = vsel %vm27, %v185, %v187
  %v190 = vmul.f32 %v178, %v188
  %v192 = vperm.slane %v183, 0
  %v193 = vperm.slane %v183, 1
  %v194 = vrot.slane %v193, 4
  %v195 = vsel %vm27, %v192, %v194
  %v197 = vmul.f32 %v179, %v195
  %v198 = vsub.f32 %v190, %v197
  %v199 = vadd.f32 %v173, %v198
  %v200 = vmul.f32 %v178, %v195
  %v201 = vmul.f32 %v179, %v188
  %v202 = vadd.f32 %v200, %v201
  %v203 = vadd.f32 %v177, %v202
  %v204 = vld [vmem:[%s98] sm:$0xff]
  %v205 = vld [vmem:[%s100] sm:$0xff]
  %s206 = scalar_lea.vmem %s130, 3
  %v207 = vld [vmem:[%s206] ss:$4 sm:$0x3]
  %s208 = scalar_lea.vmem %s132, 3
  %v209 = vld [vmem:[%s208] ss:$4 sm:$0x3]
  %v211 = vperm.slane %v207, 0
  %v212 = vperm.slane %v207, 1
  %v213 = vrot.slane %v212, 4
  %v214 = vsel %vm27, %v211, %v213
  %v216 = vmul.f32 %v204, %v214
  %v218 = vperm.slane %v209, 0
  %v219 = vperm.slane %v209, 1
  %v220 = vrot.slane %v219, 4
  %v221 = vsel %vm27, %v218, %v220
  %v223 = vmul.f32 %v205, %v221
  %v224 = vsub.f32 %v216, %v223
  %v225 = vadd.f32 %v199, %v224
  %v226 = vmul.f32 %v204, %v221
  %v227 = vmul.f32 %v205, %v214
  %v228 = vadd.f32 %v226, %v227
  %v229 = vadd.f32 %v203, %v228
  %s230 = scalar_lea.vmem %s4, 8
  %231 = vst [vmem:[%s230] sm:$0xff] %v225
  %s232 = scalar_lea.vmem %s5, 8
  %233 = vst [vmem:[%s232] sm:$0xff] %v229
  %v234 = vld [vmem:[%s0] sm:$0xff]
  %v235 = vld [vmem:[%s1] sm:$0xff]
  %s236 = scalar_lea.vmem %s2, 16
  %v237 = vld [vmem:[%s236] ss:$4 sm:$0x3]
  %s238 = scalar_lea.vmem %s3, 16
  %v239 = vld [vmem:[%s238] ss:$4 sm:$0x3]
  %v241 = vperm.slane %v237, 0
  %v242 = vperm.slane %v237, 1
  %v243 = vrot.slane %v242, 4
  %v244 = vsel %vm27, %v241, %v243
  %v246 = vmul.f32 %v234, %v244
  %v248 = vperm.slane %v239, 0
  %v249 = vperm.slane %v239, 1
  %v250 = vrot.slane %v249, 4
  %v251 = vsel %vm27, %v248, %v250
  %v253 = vmul.f32 %v235, %v251
  %v254 = vsub.f32 %v246, %v253
  %v255 = vmul.f32 %v234, %v251
  %v256 = vmul.f32 %v235, %v244
  %v257 = vadd.f32 %v255, %v256
  %v258 = vld [vmem:[%s42] sm:$0xff]
  %v259 = vld [vmem:[%s44] sm:$0xff]
  %s260 = scalar_lea.vmem %s236, 1
  %v261 = vld [vmem:[%s260] ss:$4 sm:$0x3]
  %s262 = scalar_lea.vmem %s238, 1
  %v263 = vld [vmem:[%s262] ss:$4 sm:$0x3]
  %v265 = vperm.slane %v261, 0
  %v266 = vperm.slane %v261, 1
  %v267 = vrot.slane %v266, 4
  %v268 = vsel %vm27, %v265, %v267
  %v270 = vmul.f32 %v258, %v268
  %v272 = vperm.slane %v263, 0
  %v273 = vperm.slane %v263, 1
  %v274 = vrot.slane %v273, 4
  %v275 = vsel %vm27, %v272, %v274
  %v277 = vmul.f32 %v259, %v275
  %v278 = vsub.f32 %v270, %v277
  %v279 = vadd.f32 %v254, %v278
  %v280 = vmul.f32 %v258, %v275
  %v281 = vmul.f32 %v259, %v268
  %v282 = vadd.f32 %v280, %v281
  %v283 = vadd.f32 %v257, %v282
  %v284 = vld [vmem:[%s70] sm:$0xff]
  %v285 = vld [vmem:[%s72] sm:$0xff]
  %s286 = scalar_lea.vmem %s236, 2
  %v287 = vld [vmem:[%s286] ss:$4 sm:$0x3]
  %s288 = scalar_lea.vmem %s238, 2
  %v289 = vld [vmem:[%s288] ss:$4 sm:$0x3]
  %v291 = vperm.slane %v287, 0
  %v292 = vperm.slane %v287, 1
  %v293 = vrot.slane %v292, 4
  %v294 = vsel %vm27, %v291, %v293
  %v296 = vmul.f32 %v284, %v294
  %v298 = vperm.slane %v289, 0
  %v299 = vperm.slane %v289, 1
  %v300 = vrot.slane %v299, 4
  %v301 = vsel %vm27, %v298, %v300
  %v303 = vmul.f32 %v285, %v301
  %v304 = vsub.f32 %v296, %v303
  %v305 = vadd.f32 %v279, %v304
  %v306 = vmul.f32 %v284, %v301
  %v307 = vmul.f32 %v285, %v294
  %v308 = vadd.f32 %v306, %v307
  %v309 = vadd.f32 %v283, %v308
  %v310 = vld [vmem:[%s98] sm:$0xff]
  %v311 = vld [vmem:[%s100] sm:$0xff]
  %s312 = scalar_lea.vmem %s236, 3
  %v313 = vld [vmem:[%s312] ss:$4 sm:$0x3]
  %s314 = scalar_lea.vmem %s238, 3
  %v315 = vld [vmem:[%s314] ss:$4 sm:$0x3]
  %v317 = vperm.slane %v313, 0
  %v318 = vperm.slane %v313, 1
  %v319 = vrot.slane %v318, 4
  %v320 = vsel %vm27, %v317, %v319
  %v322 = vmul.f32 %v310, %v320
  %v324 = vperm.slane %v315, 0
  %v325 = vperm.slane %v315, 1
  %v326 = vrot.slane %v325, 4
  %v327 = vsel %vm27, %v324, %v326
  %v329 = vmul.f32 %v311, %v327
  %v330 = vsub.f32 %v322, %v329
  %v331 = vadd.f32 %v305, %v330
  %v332 = vmul.f32 %v310, %v327
  %v333 = vmul.f32 %v311, %v320
  %v334 = vadd.f32 %v332, %v333
  %v335 = vadd.f32 %v309, %v334
  %s336 = scalar_lea.vmem %s4, 16
  %337 = vst [vmem:[%s336] sm:$0xff] %v331
  %s338 = scalar_lea.vmem %s5, 16
  %339 = vst [vmem:[%s338] sm:$0xff] %v335
  %v340 = vld [vmem:[%s0] sm:$0xff]
  %v341 = vld [vmem:[%s1] sm:$0xff]
  %s342 = scalar_lea.vmem %s2, 24
  %v343 = vld [vmem:[%s342] ss:$4 sm:$0x3]
  %s344 = scalar_lea.vmem %s3, 24
  %v345 = vld [vmem:[%s344] ss:$4 sm:$0x3]
  %v347 = vperm.slane %v343, 0
  %v348 = vperm.slane %v343, 1
  %v349 = vrot.slane %v348, 4
  %v350 = vsel %vm27, %v347, %v349
  %v352 = vmul.f32 %v340, %v350
  %v354 = vperm.slane %v345, 0
  %v355 = vperm.slane %v345, 1
  %v356 = vrot.slane %v355, 4
  %v357 = vsel %vm27, %v354, %v356
  %v359 = vmul.f32 %v341, %v357
  %v360 = vsub.f32 %v352, %v359
  %v361 = vmul.f32 %v340, %v357
  %v362 = vmul.f32 %v341, %v350
  %v363 = vadd.f32 %v361, %v362
  %v364 = vld [vmem:[%s42] sm:$0xff]
  %v365 = vld [vmem:[%s44] sm:$0xff]
  %s366 = scalar_lea.vmem %s342, 1
  %v367 = vld [vmem:[%s366] ss:$4 sm:$0x3]
  %s368 = scalar_lea.vmem %s344, 1
  %v369 = vld [vmem:[%s368] ss:$4 sm:$0x3]
  %v371 = vperm.slane %v367, 0
  %v372 = vperm.slane %v367, 1
  %v373 = vrot.slane %v372, 4
  %v374 = vsel %vm27, %v371, %v373
  %v376 = vmul.f32 %v364, %v374
  %v378 = vperm.slane %v369, 0
  %v379 = vperm.slane %v369, 1
  %v380 = vrot.slane %v379, 4
  %v381 = vsel %vm27, %v378, %v380
  %v383 = vmul.f32 %v365, %v381
  %v384 = vsub.f32 %v376, %v383
  %v385 = vadd.f32 %v360, %v384
  %v386 = vmul.f32 %v364, %v381
  %v387 = vmul.f32 %v365, %v374
  %v388 = vadd.f32 %v386, %v387
  %v389 = vadd.f32 %v363, %v388
  %v390 = vld [vmem:[%s70] sm:$0xff]
  %v391 = vld [vmem:[%s72] sm:$0xff]
  %s392 = scalar_lea.vmem %s342, 2
  %v393 = vld [vmem:[%s392] ss:$4 sm:$0x3]
  %s394 = scalar_lea.vmem %s344, 2
  %v395 = vld [vmem:[%s394] ss:$4 sm:$0x3]
  %v397 = vperm.slane %v393, 0
  %v398 = vperm.slane %v393, 1
  %v399 = vrot.slane %v398, 4
  %v400 = vsel %vm27, %v397, %v399
  %v402 = vmul.f32 %v390, %v400
  %v404 = vperm.slane %v395, 0
  %v405 = vperm.slane %v395, 1
  %v406 = vrot.slane %v405, 4
  %v407 = vsel %vm27, %v404, %v406
  %v409 = vmul.f32 %v391, %v407
  %v410 = vsub.f32 %v402, %v409
  %v411 = vadd.f32 %v385, %v410
  %v412 = vmul.f32 %v390, %v407
  %v413 = vmul.f32 %v391, %v400
  %v414 = vadd.f32 %v412, %v413
  %v415 = vadd.f32 %v389, %v414
  %v416 = vld [vmem:[%s98] sm:$0xff]
  %v417 = vld [vmem:[%s100] sm:$0xff]
  %s418 = scalar_lea.vmem %s342, 3
  %v419 = vld [vmem:[%s418] ss:$4 sm:$0x3]
  %s420 = scalar_lea.vmem %s344, 3
  %v421 = vld [vmem:[%s420] ss:$4 sm:$0x3]
  %v423 = vperm.slane %v419, 0
  %v424 = vperm.slane %v419, 1
  %v425 = vrot.slane %v424, 4
  %v426 = vsel %vm27, %v423, %v425
  %v428 = vmul.f32 %v416, %v426
  %v430 = vperm.slane %v421, 0
  %v431 = vperm.slane %v421, 1
  %v432 = vrot.slane %v431, 4
  %v433 = vsel %vm27, %v430, %v432
  %v435 = vmul.f32 %v417, %v433
  %v436 = vsub.f32 %v428, %v435
  %v437 = vadd.f32 %v411, %v436
  %v438 = vmul.f32 %v416, %v433
  %v439 = vmul.f32 %v417, %v426
  %v440 = vadd.f32 %v438, %v439
  %v441 = vadd.f32 %v415, %v440
  %s442 = scalar_lea.vmem %s4, 24
  %443 = vst [vmem:[%s442] sm:$0xff] %v437
  %s444 = scalar_lea.vmem %s5, 24
  %445 = vst [vmem:[%s444] sm:$0xff] %v441
  %v446 = vld [vmem:[%s0] sm:$0xff]
  %v447 = vld [vmem:[%s1] sm:$0xff]
  %s448 = scalar_lea.vmem %s2, 32
  %v449 = vld [vmem:[%s448] ss:$4 sm:$0x3]
  %s450 = scalar_lea.vmem %s3, 32
  %v451 = vld [vmem:[%s450] ss:$4 sm:$0x3]
  %v453 = vperm.slane %v449, 0
  %v454 = vperm.slane %v449, 1
  %v455 = vrot.slane %v454, 4
  %v456 = vsel %vm27, %v453, %v455
  %v458 = vmul.f32 %v446, %v456
  %v460 = vperm.slane %v451, 0
  %v461 = vperm.slane %v451, 1
  %v462 = vrot.slane %v461, 4
  %v463 = vsel %vm27, %v460, %v462
  %v465 = vmul.f32 %v447, %v463
  %v466 = vsub.f32 %v458, %v465
  %v467 = vmul.f32 %v446, %v463
  %v468 = vmul.f32 %v447, %v456
  %v469 = vadd.f32 %v467, %v468
  %v470 = vld [vmem:[%s42] sm:$0xff]
  %v471 = vld [vmem:[%s44] sm:$0xff]
  %s472 = scalar_lea.vmem %s448, 1
  %v473 = vld [vmem:[%s472] ss:$4 sm:$0x3]
  %s474 = scalar_lea.vmem %s450, 1
  %v475 = vld [vmem:[%s474] ss:$4 sm:$0x3]
  %v477 = vperm.slane %v473, 0
  %v478 = vperm.slane %v473, 1
  %v479 = vrot.slane %v478, 4
  %v480 = vsel %vm27, %v477, %v479
  %v482 = vmul.f32 %v470, %v480
  %v484 = vperm.slane %v475, 0
  %v485 = vperm.slane %v475, 1
  %v486 = vrot.slane %v485, 4
  %v487 = vsel %vm27, %v484, %v486
  %v489 = vmul.f32 %v471, %v487
  %v490 = vsub.f32 %v482, %v489
  %v491 = vadd.f32 %v466, %v490
  %v492 = vmul.f32 %v470, %v487
  %v493 = vmul.f32 %v471, %v480
  %v494 = vadd.f32 %v492, %v493
  %v495 = vadd.f32 %v469, %v494
  %v496 = vld [vmem:[%s70] sm:$0xff]
  %v497 = vld [vmem:[%s72] sm:$0xff]
  %s498 = scalar_lea.vmem %s448, 2
  %v499 = vld [vmem:[%s498] ss:$4 sm:$0x3]
  %s500 = scalar_lea.vmem %s450, 2
  %v501 = vld [vmem:[%s500] ss:$4 sm:$0x3]
  %v503 = vperm.slane %v499, 0
  %v504 = vperm.slane %v499, 1
  %v505 = vrot.slane %v504, 4
  %v506 = vsel %vm27, %v503, %v505
  %v508 = vmul.f32 %v496, %v506
  %v510 = vperm.slane %v501, 0
  %v511 = vperm.slane %v501, 1
  %v512 = vrot.slane %v511, 4
  %v513 = vsel %vm27, %v510, %v512
  %v515 = vmul.f32 %v497, %v513
  %v516 = vsub.f32 %v508, %v515
  %v517 = vadd.f32 %v491, %v516
  %v518 = vmul.f32 %v496, %v513
  %v519 = vmul.f32 %v497, %v506
  %v520 = vadd.f32 %v518, %v519
  %v521 = vadd.f32 %v495, %v520
  %v522 = vld [vmem:[%s98] sm:$0xff]
  %v523 = vld [vmem:[%s100] sm:$0xff]
  %s524 = scalar_lea.vmem %s448, 3
  %v525 = vld [vmem:[%s524] ss:$4 sm:$0x3]
  %s526 = scalar_lea.vmem %s450, 3
  %v527 = vld [vmem:[%s526] ss:$4 sm:$0x3]
  %v529 = vperm.slane %v525, 0
  %v530 = vperm.slane %v525, 1
  %v531 = vrot.slane %v530, 4
  %v532 = vsel %vm27, %v529, %v531
  %v534 = vmul.f32 %v522, %v532
  %v536 = vperm.slane %v527, 0
  %v537 = vperm.slane %v527, 1
  %v538 = vrot.slane %v537, 4
  %v539 = vsel %vm27, %v536, %v538
  %v541 = vmul.f32 %v523, %v539
  %v542 = vsub.f32 %v534, %v541
  %v543 = vadd.f32 %v517, %v542
  %v544 = vmul.f32 %v522, %v539
  %v545 = vmul.f32 %v523, %v532
  %v546 = vadd.f32 %v544, %v545
  %v547 = vadd.f32 %v521, %v546
  %s548 = scalar_lea.vmem %s4, 32
  %549 = vst [vmem:[%s548] sm:$0xff] %v543
  %s550 = scalar_lea.vmem %s5, 32
  %551 = vst [vmem:[%s550] sm:$0xff] %v547
  %v552 = vld [vmem:[%s0] sm:$0xff]
  %v553 = vld [vmem:[%s1] sm:$0xff]
  %s554 = scalar_lea.vmem %s2, 40
  %v555 = vld [vmem:[%s554] ss:$4 sm:$0x3]
  %s556 = scalar_lea.vmem %s3, 40
  %v557 = vld [vmem:[%s556] ss:$4 sm:$0x3]
  %v559 = vperm.slane %v555, 0
  %v560 = vperm.slane %v555, 1
  %v561 = vrot.slane %v560, 4
  %v562 = vsel %vm27, %v559, %v561
  %v564 = vmul.f32 %v552, %v562
  %v566 = vperm.slane %v557, 0
  %v567 = vperm.slane %v557, 1
  %v568 = vrot.slane %v567, 4
  %v569 = vsel %vm27, %v566, %v568
  %v571 = vmul.f32 %v553, %v569
  %v572 = vsub.f32 %v564, %v571
  %v573 = vmul.f32 %v552, %v569
  %v574 = vmul.f32 %v553, %v562
  %v575 = vadd.f32 %v573, %v574
  %v576 = vld [vmem:[%s42] sm:$0xff]
  %v577 = vld [vmem:[%s44] sm:$0xff]
  %s578 = scalar_lea.vmem %s554, 1
  %v579 = vld [vmem:[%s578] ss:$4 sm:$0x3]
  %s580 = scalar_lea.vmem %s556, 1
  %v581 = vld [vmem:[%s580] ss:$4 sm:$0x3]
  %v583 = vperm.slane %v579, 0
  %v584 = vperm.slane %v579, 1
  %v585 = vrot.slane %v584, 4
  %v586 = vsel %vm27, %v583, %v585
  %v588 = vmul.f32 %v576, %v586
  %v590 = vperm.slane %v581, 0
  %v591 = vperm.slane %v581, 1
  %v592 = vrot.slane %v591, 4
  %v593 = vsel %vm27, %v590, %v592
  %v595 = vmul.f32 %v577, %v593
  %v596 = vsub.f32 %v588, %v595
  %v597 = vadd.f32 %v572, %v596
  %v598 = vmul.f32 %v576, %v593
  %v599 = vmul.f32 %v577, %v586
  %v600 = vadd.f32 %v598, %v599
  %v601 = vadd.f32 %v575, %v600
  %v602 = vld [vmem:[%s70] sm:$0xff]
  %v603 = vld [vmem:[%s72] sm:$0xff]
  %s604 = scalar_lea.vmem %s554, 2
  %v605 = vld [vmem:[%s604] ss:$4 sm:$0x3]
  %s606 = scalar_lea.vmem %s556, 2
  %v607 = vld [vmem:[%s606] ss:$4 sm:$0x3]
  %v609 = vperm.slane %v605, 0
  %v610 = vperm.slane %v605, 1
  %v611 = vrot.slane %v610, 4
  %v612 = vsel %vm27, %v609, %v611
  %v614 = vmul.f32 %v602, %v612
  %v616 = vperm.slane %v607, 0
  %v617 = vperm.slane %v607, 1
  %v618 = vrot.slane %v617, 4
  %v619 = vsel %vm27, %v616, %v618
  %v621 = vmul.f32 %v603, %v619
  %v622 = vsub.f32 %v614, %v621
  %v623 = vadd.f32 %v597, %v622
  %v624 = vmul.f32 %v602, %v619
  %v625 = vmul.f32 %v603, %v612
  %v626 = vadd.f32 %v624, %v625
  %v627 = vadd.f32 %v601, %v626
  %v628 = vld [vmem:[%s98] sm:$0xff]
  %v629 = vld [vmem:[%s100] sm:$0xff]
  %s630 = scalar_lea.vmem %s554, 3
  %v631 = vld [vmem:[%s630] ss:$4 sm:$0x3]
  %s632 = scalar_lea.vmem %s556, 3
  %v633 = vld [vmem:[%s632] ss:$4 sm:$0x3]
  %v635 = vperm.slane %v631, 0
  %v636 = vperm.slane %v631, 1
  %v637 = vrot.slane %v636, 4
  %v638 = vsel %vm27, %v635, %v637
  %v640 = vmul.f32 %v628, %v638
  %v642 = vperm.slane %v633, 0
  %v643 = vperm.slane %v633, 1
  %v644 = vrot.slane %v643, 4
  %v645 = vsel %vm27, %v642, %v644
  %v647 = vmul.f32 %v629, %v645
  %v648 = vsub.f32 %v640, %v647
  %v649 = vadd.f32 %v623, %v648
  %v650 = vmul.f32 %v628, %v645
  %v651 = vmul.f32 %v629, %v638
  %v652 = vadd.f32 %v650, %v651
  %v653 = vadd.f32 %v627, %v652
  %s654 = scalar_lea.vmem %s4, 40
  %655 = vst [vmem:[%s654] sm:$0xff] %v649
  %s656 = scalar_lea.vmem %s5, 40
  %657 = vst [vmem:[%s656] sm:$0xff] %v653
  %v658 = vld [vmem:[%s0] sm:$0xff]
  %v659 = vld [vmem:[%s1] sm:$0xff]
  %s660 = scalar_lea.vmem %s2, 48
  %v661 = vld [vmem:[%s660] ss:$4 sm:$0x3]
  %s662 = scalar_lea.vmem %s3, 48
  %v663 = vld [vmem:[%s662] ss:$4 sm:$0x3]
  %v665 = vperm.slane %v661, 0
  %v666 = vperm.slane %v661, 1
  %v667 = vrot.slane %v666, 4
  %v668 = vsel %vm27, %v665, %v667
  %v670 = vmul.f32 %v658, %v668
  %v672 = vperm.slane %v663, 0
  %v673 = vperm.slane %v663, 1
  %v674 = vrot.slane %v673, 4
  %v675 = vsel %vm27, %v672, %v674
  %v677 = vmul.f32 %v659, %v675
  %v678 = vsub.f32 %v670, %v677
  %v679 = vmul.f32 %v658, %v675
  %v680 = vmul.f32 %v659, %v668
  %v681 = vadd.f32 %v679, %v680
  %v682 = vld [vmem:[%s42] sm:$0xff]
  %v683 = vld [vmem:[%s44] sm:$0xff]
  %s684 = scalar_lea.vmem %s660, 1
  %v685 = vld [vmem:[%s684] ss:$4 sm:$0x3]
  %s686 = scalar_lea.vmem %s662, 1
  %v687 = vld [vmem:[%s686] ss:$4 sm:$0x3]
  %v689 = vperm.slane %v685, 0
  %v690 = vperm.slane %v685, 1
  %v691 = vrot.slane %v690, 4
  %v692 = vsel %vm27, %v689, %v691
  %v694 = vmul.f32 %v682, %v692
  %v696 = vperm.slane %v687, 0
  %v697 = vperm.slane %v687, 1
  %v698 = vrot.slane %v697, 4
  %v699 = vsel %vm27, %v696, %v698
  %v701 = vmul.f32 %v683, %v699
  %v702 = vsub.f32 %v694, %v701
  %v703 = vadd.f32 %v678, %v702
  %v704 = vmul.f32 %v682, %v699
  %v705 = vmul.f32 %v683, %v692
  %v706 = vadd.f32 %v704, %v705
  %v707 = vadd.f32 %v681, %v706
  %v708 = vld [vmem:[%s70] sm:$0xff]
  %v709 = vld [vmem:[%s72] sm:$0xff]
  %s710 = scalar_lea.vmem %s660, 2
  %v711 = vld [vmem:[%s710] ss:$4 sm:$0x3]
  %s712 = scalar_lea.vmem %s662, 2
  %v713 = vld [vmem:[%s712] ss:$4 sm:$0x3]
  %v715 = vperm.slane %v711, 0
  %v716 = vperm.slane %v711, 1
  %v717 = vrot.slane %v716, 4
  %v718 = vsel %vm27, %v715, %v717
  %v720 = vmul.f32 %v708, %v718
  %v722 = vperm.slane %v713, 0
  %v723 = vperm.slane %v713, 1
  %v724 = vrot.slane %v723, 4
  %v725 = vsel %vm27, %v722, %v724
  %v727 = vmul.f32 %v709, %v725
  %v728 = vsub.f32 %v720, %v727
  %v729 = vadd.f32 %v703, %v728
  %v730 = vmul.f32 %v708, %v725
  %v731 = vmul.f32 %v709, %v718
  %v732 = vadd.f32 %v730, %v731
  %v733 = vadd.f32 %v707, %v732
  %v734 = vld [vmem:[%s98] sm:$0xff]
  %v735 = vld [vmem:[%s100] sm:$0xff]
  %s736 = scalar_lea.vmem %s660, 3
  %v737 = vld [vmem:[%s736] ss:$4 sm:$0x3]
  %s738 = scalar_lea.vmem %s662, 3
  %v739 = vld [vmem:[%s738] ss:$4 sm:$0x3]
  %v741 = vperm.slane %v737, 0
  %v742 = vperm.slane %v737, 1
  %v743 = vrot.slane %v742, 4
  %v744 = vsel %vm27, %v741, %v743
  %v746 = vmul.f32 %v734, %v744
  %v748 = vperm.slane %v739, 0
  %v749 = vperm.slane %v739, 1
  %v750 = vrot.slane %v749, 4
  %v751 = vsel %vm27, %v748, %v750
  %v753 = vmul.f32 %v735, %v751
  %v754 = vsub.f32 %v746, %v753
  %v755 = vadd.f32 %v729, %v754
  %v756 = vmul.f32 %v734, %v751
  %v757 = vmul.f32 %v735, %v744
  %v758 = vadd.f32 %v756, %v757
  %v759 = vadd.f32 %v733, %v758
  %s760 = scalar_lea.vmem %s4, 48
  %761 = vst [vmem:[%s760] sm:$0xff] %v755
  %s762 = scalar_lea.vmem %s5, 48
  %763 = vst [vmem:[%s762] sm:$0xff] %v759
  %v764 = vld [vmem:[%s0] sm:$0xff]
  %v765 = vld [vmem:[%s1] sm:$0xff]
  %s766 = scalar_lea.vmem %s2, 56
  %v767 = vld [vmem:[%s766] ss:$4 sm:$0x3]
  %s768 = scalar_lea.vmem %s3, 56
  %v769 = vld [vmem:[%s768] ss:$4 sm:$0x3]
  %v771 = vperm.slane %v767, 0
  %v772 = vperm.slane %v767, 1
  %v773 = vrot.slane %v772, 4
  %v774 = vsel %vm27, %v771, %v773
  %v776 = vmul.f32 %v764, %v774
  %v778 = vperm.slane %v769, 0
  %v779 = vperm.slane %v769, 1
  %v780 = vrot.slane %v779, 4
  %v781 = vsel %vm27, %v778, %v780
  %v783 = vmul.f32 %v765, %v781
  %v784 = vsub.f32 %v776, %v783
  %v785 = vmul.f32 %v764, %v781
  %v786 = vmul.f32 %v765, %v774
  %v787 = vadd.f32 %v785, %v786
  %v788 = vld [vmem:[%s42] sm:$0xff]
  %v789 = vld [vmem:[%s44] sm:$0xff]
  %s790 = scalar_lea.vmem %s766, 1
  %v791 = vld [vmem:[%s790] ss:$4 sm:$0x3]
  %s792 = scalar_lea.vmem %s768, 1
  %v793 = vld [vmem:[%s792] ss:$4 sm:$0x3]
  %v795 = vperm.slane %v791, 0
  %v796 = vperm.slane %v791, 1
  %v797 = vrot.slane %v796, 4
  %v798 = vsel %vm27, %v795, %v797
  %v800 = vmul.f32 %v788, %v798
  %v802 = vperm.slane %v793, 0
  %v803 = vperm.slane %v793, 1
  %v804 = vrot.slane %v803, 4
  %v805 = vsel %vm27, %v802, %v804
  %v807 = vmul.f32 %v789, %v805
  %v808 = vsub.f32 %v800, %v807
  %v809 = vadd.f32 %v784, %v808
  %v810 = vmul.f32 %v788, %v805
  %v811 = vmul.f32 %v789, %v798
  %v812 = vadd.f32 %v810, %v811
  %v813 = vadd.f32 %v787, %v812
  %v814 = vld [vmem:[%s70] sm:$0xff]
  %v815 = vld [vmem:[%s72] sm:$0xff]
  %s816 = scalar_lea.vmem %s766, 2
  %v817 = vld [vmem:[%s816] ss:$4 sm:$0x3]
  %s818 = scalar_lea.vmem %s768, 2
  %v819 = vld [vmem:[%s818] ss:$4 sm:$0x3]
  %v821 = vperm.slane %v817, 0
  %v822 = vperm.slane %v817, 1
  %v823 = vrot.slane %v822, 4
  %v824 = vsel %vm27, %v821, %v823
  %v826 = vmul.f32 %v814, %v824
  %v828 = vperm.slane %v819, 0
  %v829 = vperm.slane %v819, 1
  %v830 = vrot.slane %v829, 4
  %v831 = vsel %vm27, %v828, %v830
  %v833 = vmul.f32 %v815, %v831
  %v834 = vsub.f32 %v826, %v833
  %v835 = vadd.f32 %v809, %v834
  %v836 = vmul.f32 %v814, %v831
  %v837 = vmul.f32 %v815, %v824
  %v838 = vadd.f32 %v836, %v837
  %v839 = vadd.f32 %v813, %v838
  %v840 = vld [vmem:[%s98] sm:$0xff]
  %v841 = vld [vmem:[%s100] sm:$0xff]
  %s842 = scalar_lea.vmem %s766, 3
  %v843 = vld [vmem:[%s842] ss:$4 sm:$0x3]
  %s844 = scalar_lea.vmem %s768, 3
  %v845 = vld [vmem:[%s844] ss:$4 sm:$0x3]
  %v847 = vperm.slane %v843, 0
  %v848 = vperm.slane %v843, 1
  %v849 = vrot.slane %v848, 4
  %v850 = vsel %vm27, %v847, %v849
  %v852 = vmul.f32 %v840, %v850
  %v854 = vperm.slane %v845, 0
  %v855 = vperm.slane %v845, 1
  %v856 = vrot.slane %v855, 4
  %v857 = vsel %vm27, %v854, %v856
  %v859 = vmul.f32 %v841, %v857
  %v860 = vsub.f32 %v852, %v859
  %v861 = vadd.f32 %v835, %v860
  %v862 = vmul.f32 %v840, %v857
  %v863 = vmul.f32 %v841, %v850
  %v864 = vadd.f32 %v862, %v863
  %v865 = vadd.f32 %v839, %v864
  %s866 = scalar_lea.vmem %s4, 56
  %867 = vst [vmem:[%s866] sm:$0xff] %v861
  %s868 = scalar_lea.vmem %s5, 56
  %869 = vst [vmem:[%s868] sm:$0xff] %v865
  // Predicated region
  $region18: #{_lambda_.1} parent=0 // pred_check
    _
  $region19: #{_lambda_.1} parent=0 // pred_check_branch
    %871 = sbr.rel (0) target = $region21
  $region20: #{_lambda_.1} parent=0 // pred_region
    _
  $region21: #{_lambda_.1} parent=0 // pred_fallthru
    _
  // Predicated region
  $region22: #{_lambda_.1} parent=0 // pred_check
    _
  $region23: #{_lambda_.1} parent=0 // pred_check_branch
    %873 = sbr.rel (0) target = $region25
  $region24: #{_lambda_.1} parent=0 // pred_region
    _
  $region25: #{_lambda_.1} parent=0 // pred_fallthru
    _
  // Predicated region
  $region26: #{_lambda_.1} parent=0 // pred_check
    _
  $region27: #{_lambda_.1} parent=0 // pred_check_branch
    %875 = sbr.rel (0) target = $region29
  $region28: #{_lambda_.1} parent=0 // pred_region
    _
  $region29: #{_lambda_.1} parent=0 // pred_fallthru
    _
  // Predicated region
  $region30: #{_lambda_.1} parent=0 // pred_check
    _
  $region31: #{_lambda_.1} parent=0 // pred_check_branch
    %877 = sbr.rel (0) target = $region33
  $region32: #{_lambda_.1} parent=0 // pred_region
    _
  $region33: #{_lambda_.1} parent=0 // pred_fallthru
    _

</llo_original>
